<compile_context>
chip_gen: v5e
topology: v5e:2x2
jax: 0.10.0
libtpu: 0.0.40
codegen_flags: <defaults>
</compile_context>

<pallas_src>
import functools

import jax
import jax.numpy as jnp
from jax import lax
from jax.experimental import pallas as pl
from jax.experimental.pallas import tpu as pltpu

# synthetic (small) dims consistent with the module's __init__
DIN  = 6            # input_dim[0]       (trade feature dim)
S    = 8            # len(RISK_STYLE)    (synthetic)
I    = 16           # len(RISK_INDUS)    (synthetic)
E    = 8            # indus_dim
HID  = 32           # hidden_dim
ATT  = 128          # att_dim
HCAT = S + E        # h = style width + indus-embedding width  -> sqrt_H = h**0.5

# ---- packed weight-slab row offsets (shared by host packer and kernel) ----
# all multiples of 8 so every in-kernel load is a tile-aligned full row block
R_WIH0  = 0                       # rows   0:8    wih0 fused (DIN rows used), lanes 0:3H
R_WHHBD = 8                       # rows   8:72   blockdiag(whh0, whh1), lanes 0:6H
R_WIH1  = R_WHHBD + 2 * HID       # rows  72:104  wih1 fused, lanes 0:3H
R_GRUB  = R_WIH1 + HID            # rows 104:112  GRU biases
R_QK    = R_GRUB + 8              # rows 112:136  fused [Q|K] weights (emb folded)
R_HW    = R_QK + S + I            # rows 136:168  [Wv | W1_h | W1_av | w2] by lanes
R_ATTB  = R_HW + HID              # rows 168:176  attention / MLP biases + folded BN
PW_ROWS = R_ATTB + 8              # 176
PW_LANES = 2 * ATT                # 256


def _risk_att_gru_kernel(
    act_ref, pw_ref, out_ref,
    x0_ref,                                        # VMEM scratch (T*N, 3H)
    *, seq_len, n_batch, inv_sqrt_h, neg_slope,
):
    f32 = jnp.float32
    H, H2, H3, H6 = HID, 2 * HID, 3 * HID, 6 * HID
    tn = seq_len * n_batch

    # ---- packed weight slab: tile-aligned row-block loads (slices below are
    #      register ops, hoisted once -- loop-invariant)
    wih0_blk = pw_ref[R_WIH0:R_WIH0 + 8, :]          # (8, 256)  rows DIN:8 zero
    whhbd    = pw_ref[R_WHHBD:R_WHHBD + H2, :]       # (64, 256) blockdiag(whh0, whh1)
    wih1     = pw_ref[R_WIH1:R_WIH1 + H, :][:, :H3]  # (32, 96)
    gb       = pw_ref[R_GRUB:R_GRUB + 8, :]          # (8, 256)  GRU biases
    wqk      = pw_ref[R_QK:R_QK + S + I, :]          # (24, 256) fused [Q|K] (emb folded)
    hw       = pw_ref[R_HW:R_HW + H, :]              # (32, 256) [Wv|W1_h|W1_av|w2]
    attb     = pw_ref[R_ATTB:R_ATTB + 8, :]          # (8, 256)  att/MLP biases

    # ---------------- layer-0 input projection (hoisted out of the loop) ----
    trade = act_ref[0:tn, :]                         # (T*N, 128); lanes DIN: are zero
    x0_ref[...] = (jnp.dot(trade[:, :8], wih0_blk[:, :H3],
                           preferred_element_type=f32)
                   + gb[0:1, :H3])                   # bih0 folded in, [r|z|n] lanes

    # loop-invariant pre-broadcast biases (JAX does not CSE broadcast_in_dim)
    bhh0_rz = jnp.broadcast_to(gb[1:2, :H2], (n_batch, H2))
    bhh0_n  = jnp.broadcast_to(gb[2:3, :H],  (n_batch, H))
    b1_rz   = jnp.broadcast_to(gb[3:4, :H2], (n_batch, H2))  # bih1+bhh1 (r,z)
    bih1_n  = jnp.broadcast_to(gb[4:5, :H],  (n_batch, H))
    bhh1_n  = jnp.broadcast_to(gb[5:6, :H],  (n_batch, H))

    def sigmoid(x):                                  # single-EUP sigmoid
        return 0.5 * jnp.tanh(0.5 * x) + 0.5

    def step(t, h_cat):
        # one block-diagonal MXU push covers BOTH hidden-state projections
        gh = jnp.dot(h_cat, whhbd, preferred_element_type=f32)      # (N, 256)
        gh0, gh1 = gh[:, :H3], gh[:, H3:H6]
        h0, h1 = h_cat[:, :H], h_cat[:, H:]

        # ---- layer 0 (gi0 already has bih0 folded in)
        row = pl.multiple_of(t * n_batch, n_batch)
        gi0 = x0_ref[pl.ds(row, n_batch), :]                        # (N, 3H)
        rz0 = sigmoid(gi0[:, :H2] + gh0[:, :H2] + bhh0_rz)          # fused r|z
        n0 = jnp.tanh(gi0[:, H2:] + rz0[:, :H] * (gh0[:, H2:] + bhh0_n))
        h0 = (1.0 - rz0[:, H:]) * n0 + rz0[:, H:] * h0

        # TODO(synk): inter-layer GRU dropout is training-only; identity at eval.
        # ---- layer 1
        gi1 = jnp.dot(h0, wih1, preferred_element_type=f32)         # (N, 3H)
        rz1 = sigmoid(gi1[:, :H2] + gh1[:, :H2] + b1_rz)
        n1 = jnp.tanh(gi1[:, H2:] + bih1_n + rz1[:, :H] * (gh1[:, H2:] + bhh1_n))
        h1 = (1.0 - rz1[:, H:]) * n1 + rz1[:, H:] * h1
        return jnp.concatenate([h0, h1], axis=1)                    # (N, 2H)

    h_cat = lax.fori_loop(0, seq_len, step,
                          jnp.zeros((n_batch, H2), f32), unroll=True)
    h_last = h_cat[:, H:]                                           # top-layer state

    # ---------------- risk attention ----------------
    # indus embedding folded host-side into the fused [Q|K] projection
    si = act_ref[tn:tn + n_batch, :]                                # (N, 128) [style|indus|0]
    qk = (jnp.dot(si[:, :S + I], wqk, preferred_element_type=f32)
          + attb[0:1, :])                                           # (N, 2*ATT)
    q, k = qk[:, :ATT], qk[:, ATT:]

    scores = lax.dot_general(q, k, (((1,), (1,)), ((), ())),
                             preferred_element_type=f32) * inv_sqrt_h   # q @ k.T
    scores = scores - jnp.max(scores, axis=-1, keepdims=True)
    ex = jnp.exp(scores)
    att = ex * pl.reciprocal(jnp.sum(ex, axis=-1, keepdims=True), approx=True)

    # fused h_last @ [Wv | W1_h] -> (N, 2H)
    vz = jnp.dot(h_last, hw[:, :H2], preferred_element_type=f32)
    v = vz[:, :H] + attb[1:2, :H]
    av = jnp.dot(att, v, preferred_element_type=f32)                # (N, H)

    # mlp: Linear(2H->H) -> LeakyReLU -> Dropout(id) -> BN(eval, folded) -> Linear(H->1)
    z1 = (vz[:, H:] + jnp.dot(av, hw[:, H2:H3], preferred_element_type=f32)
          + attb[2:3, :H])
    z1 = jnp.where(z1 >= 0.0, z1, neg_slope * z1)
    z1 = z1 * attb[3:4, :H] + attb[4:5, :H]                         # folded BatchNorm
    out_ref[...] = (jnp.dot(z1, hw[:, H3:H3 + 1], preferred_element_type=f32)
                    + attb[5:6, 0:1])


def pack_params(p, bn_eps=1e-5):
    """Host-side packing of the original-layout params into ONE (176,256) slab."""
    H, H2, H3 = HID, 2 * HID, 3 * HID
    f32 = jnp.float32

    def fuse_w(w):   # (3, in, H) -> (in, 3H), [r|z|n] lane order
        return jnp.concatenate([w[0], w[1], w[2]], axis=1)

    def fuse_b(b):   # (3, 1, H) -> (3H,)
        return jnp.concatenate([b[0, 0], b[1, 0], b[2, 0]], axis=0)

    pw = jnp.zeros((PW_ROWS, PW_LANES), f32)

    # GRU weights
    pw = pw.at[R_WIH0:R_WIH0 + DIN, :H3].set(fuse_w(p["wih0"]))
    pw = pw.at[R_WHHBD:R_WHHBD + H, :H3].set(fuse_w(p["whh0"]))            # block-diag
    pw = pw.at[R_WHHBD + H:R_WHHBD + 2 * H, H3:2 * H3].set(fuse_w(p["whh1"]))
    pw = pw.at[R_WIH1:R_WIH1 + H, :H3].set(fuse_w(p["wih1"]))

    # GRU biases
    bih0, bhh0 = fuse_b(p["bih0"]), fuse_b(p["bhh0"])
    bih1, bhh1 = fuse_b(p["bih1"]), fuse_b(p["bhh1"])
    pw = pw.at[R_GRUB + 0, :H3].set(bih0)                   # folded into pre-projection
    pw = pw.at[R_GRUB + 1, :H2].set(bhh0[:H2])              # layer0 r,z hidden bias
    pw = pw.at[R_GRUB + 2, :H].set(bhh0[H2:])               # layer0 n hidden bias
    pw = pw.at[R_GRUB + 3, :H2].set(bih1[:H2] + bhh1[:H2])  # layer1 r,z fused bias
    pw = pw.at[R_GRUB + 4, :H].set(bih1[H2:])               # layer1 n input bias
    pw = pw.at[R_GRUB + 5, :H].set(bhh1[H2:])               # layer1 n hidden bias

    # fused [Q|K] projection with the indus-embedding Linear folded in:
    #   q = style@Wq_s + indus@(W_emb@Wq_e) + (bq + b_emb@Wq_e)   (exact)
    wq_ind = p["w_emb"] @ p["wq_e"]
    wk_ind = p["w_emb"] @ p["wk_e"]
    pw = pw.at[R_QK:R_QK + S, 0:ATT].set(p["wq_s"])
    pw = pw.at[R_QK:R_QK + S, ATT:].set(p["wk_s"])
    pw = pw.at[R_QK + S:R_QK + S + I, 0:ATT].set(wq_ind)
    pw = pw.at[R_QK + S:R_QK + S + I, ATT:].set(wk_ind)

    # [Wv | W1_h | W1_av | w2] by lanes
    pw = pw.at[R_HW:R_HW + H, 0:H].set(p["wv"])
    pw = pw.at[R_HW:R_HW + H, H:H2].set(p["w1_h"])
    pw = pw.at[R_HW:R_HW + H, H2:H3].set(p["w1_av"])
    pw = pw.at[R_HW:R_HW + H, H3:H3 + 1].set(p["w2"])

    # attention / MLP biases + eval-mode BatchNorm fold
    bn_scale = p["bn_g"][0] / jnp.sqrt(p["bn_v"][0] + bn_eps)
    bn_shift = p["bn_b"][0] - p["bn_m"][0] * bn_scale
    bq2 = p["bq"][0] + p["b_emb"][0] @ p["wq_e"]
    bk2 = p["bk"][0] + p["b_emb"][0] @ p["wk_e"]
    pw = pw.at[R_ATTB + 0, 0:ATT].set(bq2)
    pw = pw.at[R_ATTB + 0, ATT:].set(bk2)
    pw = pw.at[R_ATTB + 1, 0:H].set(p["bv"][0])
    pw = pw.at[R_ATTB + 2, 0:H].set(p["b1"][0])
    pw = pw.at[R_ATTB + 3, 0:H].set(bn_scale)
    pw = pw.at[R_ATTB + 4, 0:H].set(bn_shift)
    pw = pw.at[R_ATTB + 5, 0:1].set(p["b2"][0])
    return pw


@jax.jit
def risk_att_gru_forward(trade, style, indus, pw):
    n, t, _ = trade.shape
    tn = t * n
    # pack trade/style/indus into ONE lane-padded activation slab (1 input DMA)
    trade_2d = jnp.transpose(trade, (1, 0, 2)).reshape(tn, DIN).astype(jnp.float32)
    act = jnp.zeros((tn + n, 128), jnp.float32)
    act = act.at[:tn, :DIN].set(trade_2d)                       # time-major trade
    act = act.at[tn:tn + n, :S].set(style[:, 0, :].astype(jnp.float32))
    act = act.at[tn:tn + n, S:S + I].set(indus[:, 0, :].astype(jnp.float32))

    kernel = functools.partial(
        _risk_att_gru_kernel,
        seq_len=t, n_batch=n,
        inv_sqrt_h=1.0 / (float(HCAT) ** 0.5), neg_slope=0.01,
    )
    return pl.pallas_call(
        kernel,
        out_shape=jax.ShapeDtypeStruct((n, 1), jnp.float32),
        in_specs=[pl.BlockSpec(memory_space=pltpu.MemorySpace.VMEM),
                  pl.BlockSpec(memory_space=pltpu.MemorySpace.VMEM)],
        out_specs=pl.BlockSpec(memory_space=pltpu.MemorySpace.VMEM),
        scratch_shapes=[pltpu.VMEM((tn, 3 * HID), jnp.float32)],
    )(act, pw)


def init_params(key):
    def uni(k, shape, fan_in):
        bound = 1.0 / (fan_in ** 0.5)
        return jax.random.uniform(k, shape, jnp.float32, -bound, bound)

    keys = iter(jax.random.split(key, 32))
    p = {}
    p["w_emb"] = uni(next(keys), (I, E), I)
    p["b_emb"] = uni(next(keys), (1, E), I)
    p["wq_s"] = uni(next(keys), (S, ATT), HCAT)
    p["wq_e"] = uni(next(keys), (E, ATT), HCAT)
    p["bq"]   = uni(next(keys), (1, ATT), HCAT)
    p["wk_s"] = uni(next(keys), (S, ATT), HCAT)
    p["wk_e"] = uni(next(keys), (E, ATT), HCAT)
    p["bk"]   = uni(next(keys), (1, ATT), HCAT)
    p["wv"]   = uni(next(keys), (HID, HID), HID)
    p["bv"]   = uni(next(keys), (1, HID), HID)
    p["wih0"] = uni(next(keys), (3, DIN, HID), HID)
    p["whh0"] = uni(next(keys), (3, HID, HID), HID)
    p["bih0"] = uni(next(keys), (3, 1, HID), HID)
    p["bhh0"] = uni(next(keys), (3, 1, HID), HID)
    p["wih1"] = uni(next(keys), (3, HID, HID), HID)
    p["whh1"] = uni(next(keys), (3, HID, HID), HID)
    p["bih1"] = uni(next(keys), (3, 1, HID), HID)
    p["bhh1"] = uni(next(keys), (3, 1, HID), HID)
    p["w1_h"]  = uni(next(keys), (HID, HID), 2 * HID)
    p["w1_av"] = uni(next(keys), (HID, HID), 2 * HID)
    p["b1"]    = uni(next(keys), (1, HID), 2 * HID)
    p["bn_g"] = jnp.ones((1, HID), jnp.float32)    # BatchNorm1d default init
    p["bn_b"] = jnp.zeros((1, HID), jnp.float32)
    p["bn_m"] = jnp.zeros((1, HID), jnp.float32)   # running mean
    p["bn_v"] = jnp.ones((1, HID), jnp.float32)    # running var
    p["w2"] = uni(next(keys), (HID, 1), HID)
    p["b2"] = uni(next(keys), (1, 1), HID)
    return p


def reference_forward(trade, style, indus, p):
    """Pure-JAX mirror of the PyTorch forward (eval mode), original layout."""
    emb = indus[:, 0, :] @ p["w_emb"] + p["b_emb"][0]
    risk = jnp.concatenate([style[:, 0, :], emb], axis=-1)           # (N, HCAT)
    wq = jnp.concatenate([p["wq_s"], p["wq_e"]], axis=0)
    wk = jnp.concatenate([p["wk_s"], p["wk_e"]], axis=0)
    q = risk @ wq + p["bq"][0]
    k = risk @ wk + p["bk"][0]
    att = jax.nn.softmax((q @ k.T) / (HCAT ** 0.5), axis=-1)

    def cell(xt, h, wih, whh, bih, bhh):
        gr = xt @ wih[0] + bih[0] + h @ whh[0] + bhh[0]
        gz = xt @ wih[1] + bih[1] + h @ whh[1] + bhh[1]
        hn = h @ whh[2] + bhh[2]
        r = jax.nn.sigmoid(gr)
        z = jax.nn.sigmoid(gz)
        n = jnp.tanh(xt @ wih[2] + bih[2] + r * hn)
        return (1.0 - z) * n + z * h

    n_batch, t_len, _ = trade.shape
    h0 = jnp.zeros((n_batch, HID), jnp.float32)
    h1 = jnp.zeros((n_batch, HID), jnp.float32)
    for t in range(t_len):
        xt = trade[:, t, :]
        h0 = cell(xt, h0, p["wih0"], p["whh0"], p["bih0"], p["bhh0"])
        h1 = cell(h0, h1, p["wih1"], p["whh1"], p["bih1"], p["bhh1"])

    v = h1 @ p["wv"] + p["bv"][0]
    z = jnp.concatenate([h1, att @ v], axis=-1)
    w1 = jnp.concatenate([p["w1_h"], p["w1_av"]], axis=0)
    z1 = z @ w1 + p["b1"][0]
    z1 = jnp.where(z1 >= 0.0, z1, 0.01 * z1)
    z1 = (z1 - p["bn_m"][0]) / jnp.sqrt(p["bn_v"][0] + 1e-5) * p["bn_g"][0] + p["bn_b"][0]
    return z1 @ p["w2"] + p["b2"][0]


if __name__ == "__main__":
    key = jax.random.PRNGKey(0)
    kp, kt, ks, ki = jax.random.split(key, 4)

    N, T = 8, 8
    trade = jax.random.normal(kt, (N, T, DIN), jnp.float32)
    style = jax.random.normal(ks, (N, 1, S), jnp.float32)
    indus = jax.random.normal(ki, (N, 1, I), jnp.float32)
    params = init_params(kp)
    pw = pack_params(params)

    out = risk_att_gru_forward(trade, style, indus, pw)
    out = jax.block_until_ready(out)
    assert out.shape == (N, 1), out.shape

    ref = reference_forward(trade, style, indus, params)
    if not jnp.allclose(out, ref, rtol=1e-3, atol=1e-3):
        raise AssertionError(
            f"mismatch vs reference: max abs err = {float(jnp.max(jnp.abs(out - ref)))}"
        )
    print("KERNEL_OK")
</pallas_src>

<mosaic_0001>
module attributes {stable_mosaic.version = 11 : i64} {
  func.func @_risk_att_gru_kernel(%arg0: memref<72x128xf32, #tpu.memory_space<vmem>>, %arg1: memref<176x256xf32, #tpu.memory_space<vmem>>, %arg2: memref<8x1xf32, #tpu.memory_space<vmem>>, %arg3: memref<64x96xf32, #tpu.memory_space<vmem>>) attributes {dimension_semantics = [], scalar_prefetch = 0 : i64, scratch_operands = 1 : i64, tpu.core_type = #tpu.core_type<tc>} {
    %c0 = arith.constant 0 : index
    %c0_0 = arith.constant 0 : index
    %0 = vector.load %arg1[%c0, %c0_0] : memref<176x256xf32, #tpu.memory_space<vmem>>, vector<8x256xf32>
    %c8 = arith.constant 8 : index
    %c0_1 = arith.constant 0 : index
    %1 = vector.load %arg1[%c8, %c0_1] : memref<176x256xf32, #tpu.memory_space<vmem>>, vector<64x256xf32>
    %c72 = arith.constant 72 : index
    %c0_2 = arith.constant 0 : index
    %2 = vector.load %arg1[%c72, %c0_2] : memref<176x256xf32, #tpu.memory_space<vmem>>, vector<32x256xf32>
    %3 = vector.extract_strided_slice %2 {offsets = [0, 0], sizes = [32, 96], strides = [1, 1]} : vector<32x256xf32> to vector<32x96xf32>
    %c104 = arith.constant 104 : index
    %c0_3 = arith.constant 0 : index
    %4 = vector.load %arg1[%c104, %c0_3] : memref<176x256xf32, #tpu.memory_space<vmem>>, vector<8x256xf32>
    %c112 = arith.constant 112 : index
    %c0_4 = arith.constant 0 : index
    %5 = vector.load %arg1[%c112, %c0_4] : memref<176x256xf32, #tpu.memory_space<vmem>>, vector<24x256xf32>
    %c136 = arith.constant 136 : index
    %c0_5 = arith.constant 0 : index
    %6 = vector.load %arg1[%c136, %c0_5] : memref<176x256xf32, #tpu.memory_space<vmem>>, vector<32x256xf32>
    %c168 = arith.constant 168 : index
    %c0_6 = arith.constant 0 : index
    %7 = vector.load %arg1[%c168, %c0_6] : memref<176x256xf32, #tpu.memory_space<vmem>>, vector<8x256xf32>
    %c0_7 = arith.constant 0 : index
    %c0_8 = arith.constant 0 : index
    %8 = vector.load %arg0[%c0_7, %c0_8] : memref<72x128xf32, #tpu.memory_space<vmem>>, vector<64x128xf32>
    %9 = vector.extract_strided_slice %8 {offsets = [0, 0], sizes = [64, 8], strides = [1, 1]} : vector<64x128xf32> to vector<64x8xf32>
    %10 = vector.extract_strided_slice %0 {offsets = [0, 0], sizes = [8, 96], strides = [1, 1]} : vector<8x256xf32> to vector<8x96xf32>
    %cst = arith.constant dense<0.000000e+00> : vector<64x96xf32>
    %11 = tpu.matmul %9, %10, %cst {dimension_numbers = #tpu.dot_dimension_numbers<[1], [0], [0], [1], [0, 0, 1, 1], [], []>} : vector<64x8xf32>, vector<8x96xf32>, vector<64x96xf32> -> vector<64x96xf32>
    %12 = vector.extract_strided_slice %4 {offsets = [0, 0], sizes = [1, 96], strides = [1, 1]} : vector<8x256xf32> to vector<1x96xf32>
    %13 = vector.broadcast %12 : vector<1x96xf32> to vector<64x96xf32>
    %14 = arith.addf %11, %13 : vector<64x96xf32>
    %c0_9 = arith.constant 0 : index
    %c0_10 = arith.constant 0 : index
    %15 = vector.load %arg3[%c0_9, %c0_10] : memref<64x96xf32, #tpu.memory_space<vmem>>, vector<64x96xf32>
    tpu.vector_store %arg3[%c0_9, %c0_10], %14 {strides = array<i32>} : memref<64x96xf32, #tpu.memory_space<vmem>>, vector<64x96xf32>,
    %16 = vector.extract_strided_slice %4 {offsets = [1, 0], sizes = [1, 64], strides = [1, 1]} : vector<8x256xf32> to vector<1x64xf32>
    %17 = vector.shape_cast %16 : vector<1x64xf32> to vector<1x64xf32>
    %18 = vector.broadcast %17 : vector<1x64xf32> to vector<8x64xf32>
    %19 = vector.extract_strided_slice %4 {offsets = [2, 0], sizes = [1, 32], strides = [1, 1]} : vector<8x256xf32> to vector<1x32xf32>
    %20 = vector.shape_cast %19 : vector<1x32xf32> to vector<1x32xf32>
    %21 = vector.broadcast %20 : vector<1x32xf32> to vector<8x32xf32>
    %22 = vector.extract_strided_slice %4 {offsets = [3, 0], sizes = [1, 64], strides = [1, 1]} : vector<8x256xf32> to vector<1x64xf32>
    %23 = vector.shape_cast %22 : vector<1x64xf32> to vector<1x64xf32>
    %24 = vector.broadcast %23 : vector<1x64xf32> to vector<8x64xf32>
    %25 = vector.extract_strided_slice %4 {offsets = [4, 0], sizes = [1, 32], strides = [1, 1]} : vector<8x256xf32> to vector<1x32xf32>
    %26 = vector.shape_cast %25 : vector<1x32xf32> to vector<1x32xf32>
    %27 = vector.broadcast %26 : vector<1x32xf32> to vector<8x32xf32>
    %28 = vector.extract_strided_slice %4 {offsets = [5, 0], sizes = [1, 32], strides = [1, 1]} : vector<8x256xf32> to vector<1x32xf32>
    %29 = vector.shape_cast %28 : vector<1x32xf32> to vector<1x32xf32>
    %30 = vector.broadcast %29 : vector<1x32xf32> to vector<8x32xf32>
    %cst_11 = arith.constant 0.000000e+00 : f32
    %31 = vector.broadcast %cst_11 : f32 to vector<8x64xf32>
    %c0_i32 = arith.constant 0 : i32
    %cst_12 = arith.constant dense<0.000000e+00> : vector<8x256xf32>
    %32 = tpu.matmul %31, %1, %cst_12 {dimension_numbers = #tpu.dot_dimension_numbers<[1], [0], [0], [1], [0, 0, 1, 1], [], []>} : vector<8x64xf32>, vector<64x256xf32>, vector<8x256xf32> -> vector<8x256xf32>
    %33 = vector.extract_strided_slice %32 {offsets = [0, 0], sizes = [8, 96], strides = [1, 1]} : vector<8x256xf32> to vector<8x96xf32>
    %34 = vector.extract_strided_slice %32 {offsets = [0, 96], sizes = [8, 96], strides = [1, 1]} : vector<8x256xf32> to vector<8x96xf32>
    %35 = vector.extract_strided_slice %31 {offsets = [0, 0], sizes = [8, 32], strides = [1, 1]} : vector<8x64xf32> to vector<8x32xf32>
    %36 = vector.extract_strided_slice %31 {offsets = [0, 32], sizes = [8, 32], strides = [1, 1]} : vector<8x64xf32> to vector<8x32xf32>
    %c8_i32 = arith.constant 8 : i32
    %37 = arith.muli %c0_i32, %c8_i32 : i32
    %38 = tpu.assume_multiple %37, 8 : i32
    %39 = arith.index_cast %38 : i32 to index
    %c0_13 = arith.constant 0 : index
    %40 = vector.load %arg3[%39, %c0_13] : memref<64x96xf32, #tpu.memory_space<vmem>>, vector<8x96xf32>
    %41 = vector.extract_strided_slice %40 {offsets = [0, 0], sizes = [8, 64], strides = [1, 1]} : vector<8x96xf32> to vector<8x64xf32>
    %42 = vector.extract_strided_slice %33 {offsets = [0, 0], sizes = [8, 64], strides = [1, 1]} : vector<8x96xf32> to vector<8x64xf32>
    %43 = arith.addf %41, %42 : vector<8x64xf32>
    %44 = arith.addf %43, %18 : vector<8x64xf32>
    %cst_14 = arith.constant 5.000000e-01 : f32
    %45 = vector.broadcast %cst_14 : f32 to vector<8x64xf32>
    %46 = arith.mulf %45, %44 : vector<8x64xf32>
    %47 = math.tanh %46 : vector<8x64xf32>
    %cst_15 = arith.constant 5.000000e-01 : f32
    %48 = vector.broadcast %cst_15 : f32 to vector<8x64xf32>
    %49 = arith.mulf %48, %47 : vector<8x64xf32>
    %cst_16 = arith.constant 5.000000e-01 : f32
    %50 = vector.broadcast %cst_16 : f32 to vector<8x64xf32>
    %51 = arith.addf %49, %50 : vector<8x64xf32>
    %52 = vector.extract_strided_slice %40 {offsets = [0, 64], sizes = [8, 32], strides = [1, 1]} : vector<8x96xf32> to vector<8x32xf32>
    %53 = vector.extract_strided_slice %51 {offsets = [0, 0], sizes = [8, 32], strides = [1, 1]} : vector<8x64xf32> to vector<8x32xf32>
    %54 = vector.extract_strided_slice %33 {offsets = [0, 64], sizes = [8, 32], strides = [1, 1]} : vector<8x96xf32> to vector<8x32xf32>
    %55 = arith.addf %54, %21 : vector<8x32xf32>
    %56 = arith.mulf %53, %55 : vector<8x32xf32>
    %57 = arith.addf %52, %56 : vector<8x32xf32>
    %58 = math.tanh %57 : vector<8x32xf32>
    %59 = vector.extract_strided_slice %51 {offsets = [0, 32], sizes = [8, 32], strides = [1, 1]} : vector<8x64xf32> to vector<8x32xf32>
    %cst_17 = arith.constant 1.000000e+00 : f32
    %60 = vector.broadcast %cst_17 : f32 to vector<8x32xf32>
    %61 = arith.subf %60, %59 : vector<8x32xf32>
    %62 = arith.mulf %61, %58 : vector<8x32xf32>
    %63 = vector.extract_strided_slice %51 {offsets = [0, 32], sizes = [8, 32], strides = [1, 1]} : vector<8x64xf32> to vector<8x32xf32>
    %64 = arith.mulf %63, %35 : vector<8x32xf32>
    %65 = arith.addf %62, %64 : vector<8x32xf32>
    %cst_18 = arith.constant dense<0.000000e+00> : vector<8x96xf32>
    %66 = tpu.matmul %65, %3, %cst_18 {dimension_numbers = #tpu.dot_dimension_numbers<[1], [0], [0], [1], [0, 0, 1, 1], [], []>} : vector<8x32xf32>, vector<32x96xf32>, vector<8x96xf32> -> vector<8x96xf32>
    %67 = vector.extract_strided_slice %66 {offsets = [0, 0], sizes = [8, 64], strides = [1, 1]} : vector<8x96xf32> to vector<8x64xf32>
    %68 = vector.extract_strided_slice %34 {offsets = [0, 0], sizes = [8, 64], strides = [1, 1]} : vector<8x96xf32> to vector<8x64xf32>
    %69 = arith.addf %67, %68 : vector<8x64xf32>
    %70 = arith.addf %69, %24 : vector<8x64xf32>
    %cst_19 = arith.constant 5.000000e-01 : f32
    %71 = vector.broadcast %cst_19 : f32 to vector<8x64xf32>
    %72 = arith.mulf %71, %70 : vector<8x64xf32>
    %73 = math.tanh %72 : vector<8x64xf32>
    %cst_20 = arith.constant 5.000000e-01 : f32
    %74 = vector.broadcast %cst_20 : f32 to vector<8x64xf32>
    %75 = arith.mulf %74, %73 : vector<8x64xf32>
    %cst_21 = arith.constant 5.000000e-01 : f32
    %76 = vector.broadcast %cst_21 : f32 to vector<8x64xf32>
    %77 = arith.addf %75, %76 : vector<8x64xf32>
    %78 = vector.extract_strided_slice %66 {offsets = [0, 64], sizes = [8, 32], strides = [1, 1]} : vector<8x96xf32> to vector<8x32xf32>
    %79 = arith.addf %78, %27 : vector<8x32xf32>
    %80 = vector.extract_strided_slice %77 {offsets = [0, 0], sizes = [8, 32], strides = [1, 1]} : vector<8x64xf32> to vector<8x32xf32>
    %81 = vector.extract_strided_slice %34 {offsets = [0, 64], sizes = [8, 32], strides = [1, 1]} : vector<8x96xf32> to vector<8x32xf32>
    %82 = arith.addf %81, %30 : vector<8x32xf32>
    %83 = arith.mulf %80, %82 : vector<8x32xf32>
    %84 = arith.addf %79, %83 : vector<8x32xf32>
    %85 = math.tanh %84 : vector<8x32xf32>
    %86 = vector.extract_strided_slice %77 {offsets = [0, 32], sizes = [8, 32], strides = [1, 1]} : vector<8x64xf32> to vector<8x32xf32>
    %cst_22 = arith.constant 1.000000e+00 : f32
    %87 = vector.broadcast %cst_22 : f32 to vector<8x32xf32>
    %88 = arith.subf %87, %86 : vector<8x32xf32>
    %89 = arith.mulf %88, %85 : vector<8x32xf32>
    %90 = vector.extract_strided_slice %77 {offsets = [0, 32], sizes = [8, 32], strides = [1, 1]} : vector<8x64xf32> to vector<8x32xf32>
    %91 = arith.mulf %90, %36 : vector<8x32xf32>
    %92 = arith.addf %89, %91 : vector<8x32xf32>
    %93 = tpu.concatenate %65, %92 in 1 : vector<8x32xf32>, vector<8x32xf32> -> vector<8x64xf32>
    %c1_i32 = arith.constant 1 : i32
    %cst_23 = arith.constant dense<0.000000e+00> : vector<8x256xf32>
    %94 = tpu.matmul %93, %1, %cst_23 {dimension_numbers = #tpu.dot_dimension_numbers<[1], [0], [0], [1], [0, 0, 1, 1], [], []>} : vector<8x64xf32>, vector<64x256xf32>, vector<8x256xf32> -> vector<8x256xf32>
    %95 = vector.extract_strided_slice %94 {offsets = [0, 0], sizes = [8, 96], strides = [1, 1]} : vector<8x256xf32> to vector<8x96xf32>
    %96 = vector.extract_strided_slice %94 {offsets = [0, 96], sizes = [8, 96], strides = [1, 1]} : vector<8x256xf32> to vector<8x96xf32>
    %97 = vector.extract_strided_slice %93 {offsets = [0, 0], sizes = [8, 32], strides = [1, 1]} : vector<8x64xf32> to vector<8x32xf32>
    %98 = vector.extract_strided_slice %93 {offsets = [0, 32], sizes = [8, 32], strides = [1, 1]} : vector<8x64xf32> to vector<8x32xf32>
    %c8_i32_24 = arith.constant 8 : i32
    %99 = arith.muli %c1_i32, %c8_i32_24 : i32
    %100 = tpu.assume_multiple %99, 8 : i32
    %101 = arith.index_cast %100 : i32 to index
    %c0_25 = arith.constant 0 : index
    %102 = vector.load %arg3[%101, %c0_25] : memref<64x96xf32, #tpu.memory_space<vmem>>, vector<8x96xf32>
    %103 = vector.extract_strided_slice %102 {offsets = [0, 0], sizes = [8, 64], strides = [1, 1]} : vector<8x96xf32> to vector<8x64xf32>
    %104 = vector.extract_strided_slice %95 {offsets = [0, 0], sizes = [8, 64], strides = [1, 1]} : vector<8x96xf32> to vector<8x64xf32>
    %105 = arith.addf %103, %104 : vector<8x64xf32>
    %106 = arith.addf %105, %18 : vector<8x64xf32>
    %cst_26 = arith.constant 5.000000e-01 : f32
    %107 = vector.broadcast %cst_26 : f32 to vector<8x64xf32>
    %108 = arith.mulf %107, %106 : vector<8x64xf32>
    %109 = math.tanh %108 : vector<8x64xf32>
    %cst_27 = arith.constant 5.000000e-01 : f32
    %110 = vector.broadcast %cst_27 : f32 to vector<8x64xf32>
    %111 = arith.mulf %110, %109 : vector<8x64xf32>
    %cst_28 = arith.constant 5.000000e-01 : f32
    %112 = vector.broadcast %cst_28 : f32 to vector<8x64xf32>
    %113 = arith.addf %111, %112 : vector<8x64xf32>
    %114 = vector.extract_strided_slice %102 {offsets = [0, 64], sizes = [8, 32], strides = [1, 1]} : vector<8x96xf32> to vector<8x32xf32>
    %115 = vector.extract_strided_slice %113 {offsets = [0, 0], sizes = [8, 32], strides = [1, 1]} : vector<8x64xf32> to vector<8x32xf32>
    %116 = vector.extract_strided_slice %95 {offsets = [0, 64], sizes = [8, 32], strides = [1, 1]} : vector<8x96xf32> to vector<8x32xf32>
    %117 = arith.addf %116, %21 : vector<8x32xf32>
    %118 = arith.mulf %115, %117 : vector<8x32xf32>
    %119 = arith.addf %114, %118 : vector<8x32xf32>
    %120 = math.tanh %119 : vector<8x32xf32>
    %121 = vector.extract_strided_slice %113 {offsets = [0, 32], sizes = [8, 32], strides = [1, 1]} : vector<8x64xf32> to vector<8x32xf32>
    %cst_29 = arith.constant 1.000000e+00 : f32
    %122 = vector.broadcast %cst_29 : f32 to vector<8x32xf32>
    %123 = arith.subf %122, %121 : vector<8x32xf32>
    %124 = arith.mulf %123, %120 : vector<8x32xf32>
    %125 = vector.extract_strided_slice %113 {offsets = [0, 32], sizes = [8, 32], strides = [1, 1]} : vector<8x64xf32> to vector<8x32xf32>
    %126 = arith.mulf %125, %97 : vector<8x32xf32>
    %127 = arith.addf %124, %126 : vector<8x32xf32>
    %cst_30 = arith.constant dense<0.000000e+00> : vector<8x96xf32>
    %128 = tpu.matmul %127, %3, %cst_30 {dimension_numbers = #tpu.dot_dimension_numbers<[1], [0], [0], [1], [0, 0, 1, 1], [], []>} : vector<8x32xf32>, vector<32x96xf32>, vector<8x96xf32> -> vector<8x96xf32>
    %129 = vector.extract_strided_slice %128 {offsets = [0, 0], sizes = [8, 64], strides = [1, 1]} : vector<8x96xf32> to vector<8x64xf32>
    %130 = vector.extract_strided_slice %96 {offsets = [0, 0], sizes = [8, 64], strides = [1, 1]} : vector<8x96xf32> to vector<8x64xf32>
    %131 = arith.addf %129, %130 : vector<8x64xf32>
    %132 = arith.addf %131, %24 : vector<8x64xf32>
    %cst_31 = arith.constant 5.000000e-01 : f32
    %133 = vector.broadcast %cst_31 : f32 to vector<8x64xf32>
    %134 = arith.mulf %133, %132 : vector<8x64xf32>
    %135 = math.tanh %134 : vector<8x64xf32>
    %cst_32 = arith.constant 5.000000e-01 : f32
    %136 = vector.broadcast %cst_32 : f32 to vector<8x64xf32>
    %137 = arith.mulf %136, %135 : vector<8x64xf32>
    %cst_33 = arith.constant 5.000000e-01 : f32
    %138 = vector.broadcast %cst_33 : f32 to vector<8x64xf32>
    %139 = arith.addf %137, %138 : vector<8x64xf32>
    %140 = vector.extract_strided_slice %128 {offsets = [0, 64], sizes = [8, 32], strides = [1, 1]} : vector<8x96xf32> to vector<8x32xf32>
    %141 = arith.addf %140, %27 : vector<8x32xf32>
    %142 = vector.extract_strided_slice %139 {offsets = [0, 0], sizes = [8, 32], strides = [1, 1]} : vector<8x64xf32> to vector<8x32xf32>
    %143 = vector.extract_strided_slice %96 {offsets = [0, 64], sizes = [8, 32], strides = [1, 1]} : vector<8x96xf32> to vector<8x32xf32>
    %144 = arith.addf %143, %30 : vector<8x32xf32>
    %145 = arith.mulf %142, %144 : vector<8x32xf32>
    %146 = arith.addf %141, %145 : vector<8x32xf32>
    %147 = math.tanh %146 : vector<8x32xf32>
    %148 = vector.extract_strided_slice %139 {offsets = [0, 32], sizes = [8, 32], strides = [1, 1]} : vector<8x64xf32> to vector<8x32xf32>
    %cst_34 = arith.constant 1.000000e+00 : f32
    %149 = vector.broadcast %cst_34 : f32 to vector<8x32xf32>
    %150 = arith.subf %149, %148 : vector<8x32xf32>
    %151 = arith.mulf %150, %147 : vector<8x32xf32>
    %152 = vector.extract_strided_slice %139 {offsets = [0, 32], sizes = [8, 32], strides = [1, 1]} : vector<8x64xf32> to vector<8x32xf32>
    %153 = arith.mulf %152, %98 : vector<8x32xf32>
    %154 = arith.addf %151, %153 : vector<8x32xf32>
    %155 = tpu.concatenate %127, %154 in 1 : vector<8x32xf32>, vector<8x32xf32> -> vector<8x64xf32>
    %c2_i32 = arith.constant 2 : i32
    %cst_35 = arith.constant dense<0.000000e+00> : vector<8x256xf32>
    %156 = tpu.matmul %155, %1, %cst_35 {dimension_numbers = #tpu.dot_dimension_numbers<[1], [0], [0], [1], [0, 0, 1, 1], [], []>} : vector<8x64xf32>, vector<64x256xf32>, vector<8x256xf32> -> vector<8x256xf32>
    %157 = vector.extract_strided_slice %156 {offsets = [0, 0], sizes = [8, 96], strides = [1, 1]} : vector<8x256xf32> to vector<8x96xf32>
    %158 = vector.extract_strided_slice %156 {offsets = [0, 96], sizes = [8, 96], strides = [1, 1]} : vector<8x256xf32> to vector<8x96xf32>
    %159 = vector.extract_strided_slice %155 {offsets = [0, 0], sizes = [8, 32], strides = [1, 1]} : vector<8x64xf32> to vector<8x32xf32>
    %160 = vector.extract_strided_slice %155 {offsets = [0, 32], sizes = [8, 32], strides = [1, 1]} : vector<8x64xf32> to vector<8x32xf32>
    %c8_i32_36 = arith.constant 8 : i32
    %161 = arith.muli %c2_i32, %c8_i32_36 : i32
    %162 = tpu.assume_multiple %161, 8 : i32
    %163 = arith.index_cast %162 : i32 to index
    %c0_37 = arith.constant 0 : index
    %164 = vector.load %arg3[%163, %c0_37] : memref<64x96xf32, #tpu.memory_space<vmem>>, vector<8x96xf32>
    %165 = vector.extract_strided_slice %164 {offsets = [0, 0], sizes = [8, 64], strides = [1, 1]} : vector<8x96xf32> to vector<8x64xf32>
    %166 = vector.extract_strided_slice %157 {offsets = [0, 0], sizes = [8, 64], strides = [1, 1]} : vector<8x96xf32> to vector<8x64xf32>
    %167 = arith.addf %165, %166 : vector<8x64xf32>
    %168 = arith.addf %167, %18 : vector<8x64xf32>
    %cst_38 = arith.constant 5.000000e-01 : f32
    %169 = vector.broadcast %cst_38 : f32 to vector<8x64xf32>
    %170 = arith.mulf %169, %168 : vector<8x64xf32>
    %171 = math.tanh %170 : vector<8x64xf32>
    %cst_39 = arith.constant 5.000000e-01 : f32
    %172 = vector.broadcast %cst_39 : f32 to vector<8x64xf32>
    %173 = arith.mulf %172, %171 : vector<8x64xf32>
    %cst_40 = arith.constant 5.000000e-01 : f32
    %174 = vector.broadcast %cst_40 : f32 to vector<8x64xf32>
    %175 = arith.addf %173, %174 : vector<8x64xf32>
    %176 = vector.extract_strided_slice %164 {offsets = [0, 64], sizes = [8, 32], strides = [1, 1]} : vector<8x96xf32> to vector<8x32xf32>
    %177 = vector.extract_strided_slice %175 {offsets = [0, 0], sizes = [8, 32], strides = [1, 1]} : vector<8x64xf32> to vector<8x32xf32>
    %178 = vector.extract_strided_slice %157 {offsets = [0, 64], sizes = [8, 32], strides = [1, 1]} : vector<8x96xf32> to vector<8x32xf32>
    %179 = arith.addf %178, %21 : vector<8x32xf32>
    %180 = arith.mulf %177, %179 : vector<8x32xf32>
    %181 = arith.addf %176, %180 : vector<8x32xf32>
    %182 = math.tanh %181 : vector<8x32xf32>
    %183 = vector.extract_strided_slice %175 {offsets = [0, 32], sizes = [8, 32], strides = [1, 1]} : vector<8x64xf32> to vector<8x32xf32>
    %cst_41 = arith.constant 1.000000e+00 : f32
    %184 = vector.broadcast %cst_41 : f32 to vector<8x32xf32>
    %185 = arith.subf %184, %183 : vector<8x32xf32>
    %186 = arith.mulf %185, %182 : vector<8x32xf32>
    %187 = vector.extract_strided_slice %175 {offsets = [0, 32], sizes = [8, 32], strides = [1, 1]} : vector<8x64xf32> to vector<8x32xf32>
    %188 = arith.mulf %187, %159 : vector<8x32xf32>
    %189 = arith.addf %186, %188 : vector<8x32xf32>
    %cst_42 = arith.constant dense<0.000000e+00> : vector<8x96xf32>
    %190 = tpu.matmul %189, %3, %cst_42 {dimension_numbers = #tpu.dot_dimension_numbers<[1], [0], [0], [1], [0, 0, 1, 1], [], []>} : vector<8x32xf32>, vector<32x96xf32>, vector<8x96xf32> -> vector<8x96xf32>
    %191 = vector.extract_strided_slice %190 {offsets = [0, 0], sizes = [8, 64], strides = [1, 1]} : vector<8x96xf32> to vector<8x64xf32>
    %192 = vector.extract_strided_slice %158 {offsets = [0, 0], sizes = [8, 64], strides = [1, 1]} : vector<8x96xf32> to vector<8x64xf32>
    %193 = arith.addf %191, %192 : vector<8x64xf32>
    %194 = arith.addf %193, %24 : vector<8x64xf32>
    %cst_43 = arith.constant 5.000000e-01 : f32
    %195 = vector.broadcast %cst_43 : f32 to vector<8x64xf32>
    %196 = arith.mulf %195, %194 : vector<8x64xf32>
    %197 = math.tanh %196 : vector<8x64xf32>
    %cst_44 = arith.constant 5.000000e-01 : f32
    %198 = vector.broadcast %cst_44 : f32 to vector<8x64xf32>
    %199 = arith.mulf %198, %197 : vector<8x64xf32>
    %cst_45 = arith.constant 5.000000e-01 : f32
    %200 = vector.broadcast %cst_45 : f32 to vector<8x64xf32>
    %201 = arith.addf %199, %200 : vector<8x64xf32>
    %202 = vector.extract_strided_slice %190 {offsets = [0, 64], sizes = [8, 32], strides = [1, 1]} : vector<8x96xf32> to vector<8x32xf32>
    %203 = arith.addf %202, %27 : vector<8x32xf32>
    %204 = vector.extract_strided_slice %201 {offsets = [0, 0], sizes = [8, 32], strides = [1, 1]} : vector<8x64xf32> to vector<8x32xf32>
    %205 = vector.extract_strided_slice %158 {offsets = [0, 64], sizes = [8, 32], strides = [1, 1]} : vector<8x96xf32> to vector<8x32xf32>
    %206 = arith.addf %205, %30 : vector<8x32xf32>
    %207 = arith.mulf %204, %206 : vector<8x32xf32>
    %208 = arith.addf %203, %207 : vector<8x32xf32>
    %209 = math.tanh %208 : vector<8x32xf32>
    %210 = vector.extract_strided_slice %201 {offsets = [0, 32], sizes = [8, 32], strides = [1, 1]} : vector<8x64xf32> to vector<8x32xf32>
    %cst_46 = arith.constant 1.000000e+00 : f32
    %211 = vector.broadcast %cst_46 : f32 to vector<8x32xf32>
    %212 = arith.subf %211, %210 : vector<8x32xf32>
    %213 = arith.mulf %212, %209 : vector<8x32xf32>
    %214 = vector.extract_strided_slice %201 {offsets = [0, 32], sizes = [8, 32], strides = [1, 1]} : vector<8x64xf32> to vector<8x32xf32>
    %215 = arith.mulf %214, %160 : vector<8x32xf32>
    %216 = arith.addf %213, %215 : vector<8x32xf32>
    %217 = tpu.concatenate %189, %216 in 1 : vector<8x32xf32>, vector<8x32xf32> -> vector<8x64xf32>
    %c3_i32 = arith.constant 3 : i32
    %cst_47 = arith.constant dense<0.000000e+00> : vector<8x256xf32>
    %218 = tpu.matmul %217, %1, %cst_47 {dimension_numbers = #tpu.dot_dimension_numbers<[1], [0], [0], [1], [0, 0, 1, 1], [], []>} : vector<8x64xf32>, vector<64x256xf32>, vector<8x256xf32> -> vector<8x256xf32>
    %219 = vector.extract_strided_slice %218 {offsets = [0, 0], sizes = [8, 96], strides = [1, 1]} : vector<8x256xf32> to vector<8x96xf32>
    %220 = vector.extract_strided_slice %218 {offsets = [0, 96], sizes = [8, 96], strides = [1, 1]} : vector<8x256xf32> to vector<8x96xf32>
    %221 = vector.extract_strided_slice %217 {offsets = [0, 0], sizes = [8, 32], strides = [1, 1]} : vector<8x64xf32> to vector<8x32xf32>
    %222 = vector.extract_strided_slice %217 {offsets = [0, 32], sizes = [8, 32], strides = [1, 1]} : vector<8x64xf32> to vector<8x32xf32>
    %c8_i32_48 = arith.constant 8 : i32
    %223 = arith.muli %c3_i32, %c8_i32_48 : i32
    %224 = tpu.assume_multiple %223, 8 : i32
    %225 = arith.index_cast %224 : i32 to index
    %c0_49 = arith.constant 0 : index
    %226 = vector.load %arg3[%225, %c0_49] : memref<64x96xf32, #tpu.memory_space<vmem>>, vector<8x96xf32>
    %227 = vector.extract_strided_slice %226 {offsets = [0, 0], sizes = [8, 64], strides = [1, 1]} : vector<8x96xf32> to vector<8x64xf32>
    %228 = vector.extract_strided_slice %219 {offsets = [0, 0], sizes = [8, 64], strides = [1, 1]} : vector<8x96xf32> to vector<8x64xf32>
    %229 = arith.addf %227, %228 : vector<8x64xf32>
    %230 = arith.addf %229, %18 : vector<8x64xf32>
    %cst_50 = arith.constant 5.000000e-01 : f32
    %231 = vector.broadcast %cst_50 : f32 to vector<8x64xf32>
    %232 = arith.mulf %231, %230 : vector<8x64xf32>
    %233 = math.tanh %232 : vector<8x64xf32>
    %cst_51 = arith.constant 5.000000e-01 : f32
    %234 = vector.broadcast %cst_51 : f32 to vector<8x64xf32>
    %235 = arith.mulf %234, %233 : vector<8x64xf32>
    %cst_52 = arith.constant 5.000000e-01 : f32
    %236 = vector.broadcast %cst_52 : f32 to vector<8x64xf32>
    %237 = arith.addf %235, %236 : vector<8x64xf32>
    %238 = vector.extract_strided_slice %226 {offsets = [0, 64], sizes = [8, 32], strides = [1, 1]} : vector<8x96xf32> to vector<8x32xf32>
    %239 = vector.extract_strided_slice %237 {offsets = [0, 0], sizes = [8, 32], strides = [1, 1]} : vector<8x64xf32> to vector<8x32xf32>
    %240 = vector.extract_strided_slice %219 {offsets = [0, 64], sizes = [8, 32], strides = [1, 1]} : vector<8x96xf32> to vector<8x32xf32>
    %241 = arith.addf %240, %21 : vector<8x32xf32>
    %242 = arith.mulf %239, %241 : vector<8x32xf32>
    %243 = arith.addf %238, %242 : vector<8x32xf32>
    %244 = math.tanh %243 : vector<8x32xf32>
    %245 = vector.extract_strided_slice %237 {offsets = [0, 32], sizes = [8, 32], strides = [1, 1]} : vector<8x64xf32> to vector<8x32xf32>
    %cst_53 = arith.constant 1.000000e+00 : f32
    %246 = vector.broadcast %cst_53 : f32 to vector<8x32xf32>
    %247 = arith.subf %246, %245 : vector<8x32xf32>
    %248 = arith.mulf %247, %244 : vector<8x32xf32>
    %249 = vector.extract_strided_slice %237 {offsets = [0, 32], sizes = [8, 32], strides = [1, 1]} : vector<8x64xf32> to vector<8x32xf32>
    %250 = arith.mulf %249, %221 : vector<8x32xf32>
    %251 = arith.addf %248, %250 : vector<8x32xf32>
    %cst_54 = arith.constant dense<0.000000e+00> : vector<8x96xf32>
    %252 = tpu.matmul %251, %3, %cst_54 {dimension_numbers = #tpu.dot_dimension_numbers<[1], [0], [0], [1], [0, 0, 1, 1], [], []>} : vector<8x32xf32>, vector<32x96xf32>, vector<8x96xf32> -> vector<8x96xf32>
    %253 = vector.extract_strided_slice %252 {offsets = [0, 0], sizes = [8, 64], strides = [1, 1]} : vector<8x96xf32> to vector<8x64xf32>
    %254 = vector.extract_strided_slice %220 {offsets = [0, 0], sizes = [8, 64], strides = [1, 1]} : vector<8x96xf32> to vector<8x64xf32>
    %255 = arith.addf %253, %254 : vector<8x64xf32>
    %256 = arith.addf %255, %24 : vector<8x64xf32>
    %cst_55 = arith.constant 5.000000e-01 : f32
    %257 = vector.broadcast %cst_55 : f32 to vector<8x64xf32>
    %258 = arith.mulf %257, %256 : vector<8x64xf32>
    %259 = math.tanh %258 : vector<8x64xf32>
    %cst_56 = arith.constant 5.000000e-01 : f32
    %260 = vector.broadcast %cst_56 : f32 to vector<8x64xf32>
    %261 = arith.mulf %260, %259 : vector<8x64xf32>
    %cst_57 = arith.constant 5.000000e-01 : f32
    %262 = vector.broadcast %cst_57 : f32 to vector<8x64xf32>
    %263 = arith.addf %261, %262 : vector<8x64xf32>
    %264 = vector.extract_strided_slice %252 {offsets = [0, 64], sizes = [8, 32], strides = [1, 1]} : vector<8x96xf32> to vector<8x32xf32>
    %265 = arith.addf %264, %27 : vector<8x32xf32>
    %266 = vector.extract_strided_slice %263 {offsets = [0, 0], sizes = [8, 32], strides = [1, 1]} : vector<8x64xf32> to vector<8x32xf32>
    %267 = vector.extract_strided_slice %220 {offsets = [0, 64], sizes = [8, 32], strides = [1, 1]} : vector<8x96xf32> to vector<8x32xf32>
    %268 = arith.addf %267, %30 : vector<8x32xf32>
    %269 = arith.mulf %266, %268 : vector<8x32xf32>
    %270 = arith.addf %265, %269 : vector<8x32xf32>
    %271 = math.tanh %270 : vector<8x32xf32>
    %272 = vector.extract_strided_slice %263 {offsets = [0, 32], sizes = [8, 32], strides = [1, 1]} : vector<8x64xf32> to vector<8x32xf32>
    %cst_58 = arith.constant 1.000000e+00 : f32
    %273 = vector.broadcast %cst_58 : f32 to vector<8x32xf32>
    %274 = arith.subf %273, %272 : vector<8x32xf32>
    %275 = arith.mulf %274, %271 : vector<8x32xf32>
    %276 = vector.extract_strided_slice %263 {offsets = [0, 32], sizes = [8, 32], strides = [1, 1]} : vector<8x64xf32> to vector<8x32xf32>
    %277 = arith.mulf %276, %222 : vector<8x32xf32>
    %278 = arith.addf %275, %277 : vector<8x32xf32>
    %279 = tpu.concatenate %251, %278 in 1 : vector<8x32xf32>, vector<8x32xf32> -> vector<8x64xf32>
    %c4_i32 = arith.constant 4 : i32
    %cst_59 = arith.constant dense<0.000000e+00> : vector<8x256xf32>
    %280 = tpu.matmul %279, %1, %cst_59 {dimension_numbers = #tpu.dot_dimension_numbers<[1], [0], [0], [1], [0, 0, 1, 1], [], []>} : vector<8x64xf32>, vector<64x256xf32>, vector<8x256xf32> -> vector<8x256xf32>
    %281 = vector.extract_strided_slice %280 {offsets = [0, 0], sizes = [8, 96], strides = [1, 1]} : vector<8x256xf32> to vector<8x96xf32>
    %282 = vector.extract_strided_slice %280 {offsets = [0, 96], sizes = [8, 96], strides = [1, 1]} : vector<8x256xf32> to vector<8x96xf32>
    %283 = vector.extract_strided_slice %279 {offsets = [0, 0], sizes = [8, 32], strides = [1, 1]} : vector<8x64xf32> to vector<8x32xf32>
    %284 = vector.extract_strided_slice %279 {offsets = [0, 32], sizes = [8, 32], strides = [1, 1]} : vector<8x64xf32> to vector<8x32xf32>
    %c8_i32_60 = arith.constant 8 : i32
    %285 = arith.muli %c4_i32, %c8_i32_60 : i32
    %286 = tpu.assume_multiple %285, 8 : i32
    %287 = arith.index_cast %286 : i32 to index
    %c0_61 = arith.constant 0 : index
    %288 = vector.load %arg3[%287, %c0_61] : memref<64x96xf32, #tpu.memory_space<vmem>>, vector<8x96xf32>
    %289 = vector.extract_strided_slice %288 {offsets = [0, 0], sizes = [8, 64], strides = [1, 1]} : vector<8x96xf32> to vector<8x64xf32>
    %290 = vector.extract_strided_slice %281 {offsets = [0, 0], sizes = [8, 64], strides = [1, 1]} : vector<8x96xf32> to vector<8x64xf32>
    %291 = arith.addf %289, %290 : vector<8x64xf32>
    %292 = arith.addf %291, %18 : vector<8x64xf32>
    %cst_62 = arith.constant 5.000000e-01 : f32
    %293 = vector.broadcast %cst_62 : f32 to vector<8x64xf32>
    %294 = arith.mulf %293, %292 : vector<8x64xf32>
    %295 = math.tanh %294 : vector<8x64xf32>
    %cst_63 = arith.constant 5.000000e-01 : f32
    %296 = vector.broadcast %cst_63 : f32 to vector<8x64xf32>
    %297 = arith.mulf %296, %295 : vector<8x64xf32>
    %cst_64 = arith.constant 5.000000e-01 : f32
    %298 = vector.broadcast %cst_64 : f32 to vector<8x64xf32>
    %299 = arith.addf %297, %298 : vector<8x64xf32>
    %300 = vector.extract_strided_slice %288 {offsets = [0, 64], sizes = [8, 32], strides = [1, 1]} : vector<8x96xf32> to vector<8x32xf32>
    %301 = vector.extract_strided_slice %299 {offsets = [0, 0], sizes = [8, 32], strides = [1, 1]} : vector<8x64xf32> to vector<8x32xf32>
    %302 = vector.extract_strided_slice %281 {offsets = [0, 64], sizes = [8, 32], strides = [1, 1]} : vector<8x96xf32> to vector<8x32xf32>
    %303 = arith.addf %302, %21 : vector<8x32xf32>
    %304 = arith.mulf %301, %303 : vector<8x32xf32>
    %305 = arith.addf %300, %304 : vector<8x32xf32>
    %306 = math.tanh %305 : vector<8x32xf32>
    %307 = vector.extract_strided_slice %299 {offsets = [0, 32], sizes = [8, 32], strides = [1, 1]} : vector<8x64xf32> to vector<8x32xf32>
    %cst_65 = arith.constant 1.000000e+00 : f32
    %308 = vector.broadcast %cst_65 : f32 to vector<8x32xf32>
    %309 = arith.subf %308, %307 : vector<8x32xf32>
    %310 = arith.mulf %309, %306 : vector<8x32xf32>
    %311 = vector.extract_strided_slice %299 {offsets = [0, 32], sizes = [8, 32], strides = [1, 1]} : vector<8x64xf32> to vector<8x32xf32>
    %312 = arith.mulf %311, %283 : vector<8x32xf32>
    %313 = arith.addf %310, %312 : vector<8x32xf32>
    %cst_66 = arith.constant dense<0.000000e+00> : vector<8x96xf32>
    %314 = tpu.matmul %313, %3, %cst_66 {dimension_numbers = #tpu.dot_dimension_numbers<[1], [0], [0], [1], [0, 0, 1, 1], [], []>} : vector<8x32xf32>, vector<32x96xf32>, vector<8x96xf32> -> vector<8x96xf32>
    %315 = vector.extract_strided_slice %314 {offsets = [0, 0], sizes = [8, 64], strides = [1, 1]} : vector<8x96xf32> to vector<8x64xf32>
    %316 = vector.extract_strided_slice %282 {offsets = [0, 0], sizes = [8, 64], strides = [1, 1]} : vector<8x96xf32> to vector<8x64xf32>
    %317 = arith.addf %315, %316 : vector<8x64xf32>
    %318 = arith.addf %317, %24 : vector<8x64xf32>
    %cst_67 = arith.constant 5.000000e-01 : f32
    %319 = vector.broadcast %cst_67 : f32 to vector<8x64xf32>
    %320 = arith.mulf %319, %318 : vector<8x64xf32>
    %321 = math.tanh %320 : vector<8x64xf32>
    %cst_68 = arith.constant 5.000000e-01 : f32
    %322 = vector.broadcast %cst_68 : f32 to vector<8x64xf32>
    %323 = arith.mulf %322, %321 : vector<8x64xf32>
    %cst_69 = arith.constant 5.000000e-01 : f32
    %324 = vector.broadcast %cst_69 : f32 to vector<8x64xf32>
    %325 = arith.addf %323, %324 : vector<8x64xf32>
    %326 = vector.extract_strided_slice %314 {offsets = [0, 64], sizes = [8, 32], strides = [1, 1]} : vector<8x96xf32> to vector<8x32xf32>
    %327 = arith.addf %326, %27 : vector<8x32xf32>
    %328 = vector.extract_strided_slice %325 {offsets = [0, 0], sizes = [8, 32], strides = [1, 1]} : vector<8x64xf32> to vector<8x32xf32>
    %329 = vector.extract_strided_slice %282 {offsets = [0, 64], sizes = [8, 32], strides = [1, 1]} : vector<8x96xf32> to vector<8x32xf32>
    %330 = arith.addf %329, %30 : vector<8x32xf32>
    %331 = arith.mulf %328, %330 : vector<8x32xf32>
    %332 = arith.addf %327, %331 : vector<8x32xf32>
    %333 = math.tanh %332 : vector<8x32xf32>
    %334 = vector.extract_strided_slice %325 {offsets = [0, 32], sizes = [8, 32], strides = [1, 1]} : vector<8x64xf32> to vector<8x32xf32>
    %cst_70 = arith.constant 1.000000e+00 : f32
    %335 = vector.broadcast %cst_70 : f32 to vector<8x32xf32>
    %336 = arith.subf %335, %334 : vector<8x32xf32>
    %337 = arith.mulf %336, %333 : vector<8x32xf32>
    %338 = vector.extract_strided_slice %325 {offsets = [0, 32], sizes = [8, 32], strides = [1, 1]} : vector<8x64xf32> to vector<8x32xf32>
    %339 = arith.mulf %338, %284 : vector<8x32xf32>
    %340 = arith.addf %337, %339 : vector<8x32xf32>
    %341 = tpu.concatenate %313, %340 in 1 : vector<8x32xf32>, vector<8x32xf32> -> vector<8x64xf32>
    %c5_i32 = arith.constant 5 : i32
    %cst_71 = arith.constant dense<0.000000e+00> : vector<8x256xf32>
    %342 = tpu.matmul %341, %1, %cst_71 {dimension_numbers = #tpu.dot_dimension_numbers<[1], [0], [0], [1], [0, 0, 1, 1], [], []>} : vector<8x64xf32>, vector<64x256xf32>, vector<8x256xf32> -> vector<8x256xf32>
    %343 = vector.extract_strided_slice %342 {offsets = [0, 0], sizes = [8, 96], strides = [1, 1]} : vector<8x256xf32> to vector<8x96xf32>
    %344 = vector.extract_strided_slice %342 {offsets = [0, 96], sizes = [8, 96], strides = [1, 1]} : vector<8x256xf32> to vector<8x96xf32>
    %345 = vector.extract_strided_slice %341 {offsets = [0, 0], sizes = [8, 32], strides = [1, 1]} : vector<8x64xf32> to vector<8x32xf32>
    %346 = vector.extract_strided_slice %341 {offsets = [0, 32], sizes = [8, 32], strides = [1, 1]} : vector<8x64xf32> to vector<8x32xf32>
    %c8_i32_72 = arith.constant 8 : i32
    %347 = arith.muli %c5_i32, %c8_i32_72 : i32
    %348 = tpu.assume_multiple %347, 8 : i32
    %349 = arith.index_cast %348 : i32 to index
    %c0_73 = arith.constant 0 : index
    %350 = vector.load %arg3[%349, %c0_73] : memref<64x96xf32, #tpu.memory_space<vmem>>, vector<8x96xf32>
    %351 = vector.extract_strided_slice %350 {offsets = [0, 0], sizes = [8, 64], strides = [1, 1]} : vector<8x96xf32> to vector<8x64xf32>
    %352 = vector.extract_strided_slice %343 {offsets = [0, 0], sizes = [8, 64], strides = [1, 1]} : vector<8x96xf32> to vector<8x64xf32>
    %353 = arith.addf %351, %352 : vector<8x64xf32>
    %354 = arith.addf %353, %18 : vector<8x64xf32>
    %cst_74 = arith.constant 5.000000e-01 : f32
    %355 = vector.broadcast %cst_74 : f32 to vector<8x64xf32>
    %356 = arith.mulf %355, %354 : vector<8x64xf32>
    %357 = math.tanh %356 : vector<8x64xf32>
    %cst_75 = arith.constant 5.000000e-01 : f32
    %358 = vector.broadcast %cst_75 : f32 to vector<8x64xf32>
    %359 = arith.mulf %358, %357 : vector<8x64xf32>
    %cst_76 = arith.constant 5.000000e-01 : f32
    %360 = vector.broadcast %cst_76 : f32 to vector<8x64xf32>
    %361 = arith.addf %359, %360 : vector<8x64xf32>
    %362 = vector.extract_strided_slice %350 {offsets = [0, 64], sizes = [8, 32], strides = [1, 1]} : vector<8x96xf32> to vector<8x32xf32>
    %363 = vector.extract_strided_slice %361 {offsets = [0, 0], sizes = [8, 32], strides = [1, 1]} : vector<8x64xf32> to vector<8x32xf32>
    %364 = vector.extract_strided_slice %343 {offsets = [0, 64], sizes = [8, 32], strides = [1, 1]} : vector<8x96xf32> to vector<8x32xf32>
    %365 = arith.addf %364, %21 : vector<8x32xf32>
    %366 = arith.mulf %363, %365 : vector<8x32xf32>
    %367 = arith.addf %362, %366 : vector<8x32xf32>
    %368 = math.tanh %367 : vector<8x32xf32>
    %369 = vector.extract_strided_slice %361 {offsets = [0, 32], sizes = [8, 32], strides = [1, 1]} : vector<8x64xf32> to vector<8x32xf32>
    %cst_77 = arith.constant 1.000000e+00 : f32
    %370 = vector.broadcast %cst_77 : f32 to vector<8x32xf32>
    %371 = arith.subf %370, %369 : vector<8x32xf32>
    %372 = arith.mulf %371, %368 : vector<8x32xf32>
    %373 = vector.extract_strided_slice %361 {offsets = [0, 32], sizes = [8, 32], strides = [1, 1]} : vector<8x64xf32> to vector<8x32xf32>
    %374 = arith.mulf %373, %345 : vector<8x32xf32>
    %375 = arith.addf %372, %374 : vector<8x32xf32>
    %cst_78 = arith.constant dense<0.000000e+00> : vector<8x96xf32>
    %376 = tpu.matmul %375, %3, %cst_78 {dimension_numbers = #tpu.dot_dimension_numbers<[1], [0], [0], [1], [0, 0, 1, 1], [], []>} : vector<8x32xf32>, vector<32x96xf32>, vector<8x96xf32> -> vector<8x96xf32>
    %377 = vector.extract_strided_slice %376 {offsets = [0, 0], sizes = [8, 64], strides = [1, 1]} : vector<8x96xf32> to vector<8x64xf32>
    %378 = vector.extract_strided_slice %344 {offsets = [0, 0], sizes = [8, 64], strides = [1, 1]} : vector<8x96xf32> to vector<8x64xf32>
    %379 = arith.addf %377, %378 : vector<8x64xf32>
    %380 = arith.addf %379, %24 : vector<8x64xf32>
    %cst_79 = arith.constant 5.000000e-01 : f32
    %381 = vector.broadcast %cst_79 : f32 to vector<8x64xf32>
    %382 = arith.mulf %381, %380 : vector<8x64xf32>
    %383 = math.tanh %382 : vector<8x64xf32>
    %cst_80 = arith.constant 5.000000e-01 : f32
    %384 = vector.broadcast %cst_80 : f32 to vector<8x64xf32>
    %385 = arith.mulf %384, %383 : vector<8x64xf32>
    %cst_81 = arith.constant 5.000000e-01 : f32
    %386 = vector.broadcast %cst_81 : f32 to vector<8x64xf32>
    %387 = arith.addf %385, %386 : vector<8x64xf32>
    %388 = vector.extract_strided_slice %376 {offsets = [0, 64], sizes = [8, 32], strides = [1, 1]} : vector<8x96xf32> to vector<8x32xf32>
    %389 = arith.addf %388, %27 : vector<8x32xf32>
    %390 = vector.extract_strided_slice %387 {offsets = [0, 0], sizes = [8, 32], strides = [1, 1]} : vector<8x64xf32> to vector<8x32xf32>
    %391 = vector.extract_strided_slice %344 {offsets = [0, 64], sizes = [8, 32], strides = [1, 1]} : vector<8x96xf32> to vector<8x32xf32>
    %392 = arith.addf %391, %30 : vector<8x32xf32>
    %393 = arith.mulf %390, %392 : vector<8x32xf32>
    %394 = arith.addf %389, %393 : vector<8x32xf32>
    %395 = math.tanh %394 : vector<8x32xf32>
    %396 = vector.extract_strided_slice %387 {offsets = [0, 32], sizes = [8, 32], strides = [1, 1]} : vector<8x64xf32> to vector<8x32xf32>
    %cst_82 = arith.constant 1.000000e+00 : f32
    %397 = vector.broadcast %cst_82 : f32 to vector<8x32xf32>
    %398 = arith.subf %397, %396 : vector<8x32xf32>
    %399 = arith.mulf %398, %395 : vector<8x32xf32>
    %400 = vector.extract_strided_slice %387 {offsets = [0, 32], sizes = [8, 32], strides = [1, 1]} : vector<8x64xf32> to vector<8x32xf32>
    %401 = arith.mulf %400, %346 : vector<8x32xf32>
    %402 = arith.addf %399, %401 : vector<8x32xf32>
    %403 = tpu.concatenate %375, %402 in 1 : vector<8x32xf32>, vector<8x32xf32> -> vector<8x64xf32>
    %c6_i32 = arith.constant 6 : i32
    %cst_83 = arith.constant dense<0.000000e+00> : vector<8x256xf32>
    %404 = tpu.matmul %403, %1, %cst_83 {dimension_numbers = #tpu.dot_dimension_numbers<[1], [0], [0], [1], [0, 0, 1, 1], [], []>} : vector<8x64xf32>, vector<64x256xf32>, vector<8x256xf32> -> vector<8x256xf32>
    %405 = vector.extract_strided_slice %404 {offsets = [0, 0], sizes = [8, 96], strides = [1, 1]} : vector<8x256xf32> to vector<8x96xf32>
    %406 = vector.extract_strided_slice %404 {offsets = [0, 96], sizes = [8, 96], strides = [1, 1]} : vector<8x256xf32> to vector<8x96xf32>
    %407 = vector.extract_strided_slice %403 {offsets = [0, 0], sizes = [8, 32], strides = [1, 1]} : vector<8x64xf32> to vector<8x32xf32>
    %408 = vector.extract_strided_slice %403 {offsets = [0, 32], sizes = [8, 32], strides = [1, 1]} : vector<8x64xf32> to vector<8x32xf32>
    %c8_i32_84 = arith.constant 8 : i32
    %409 = arith.muli %c6_i32, %c8_i32_84 : i32
    %410 = tpu.assume_multiple %409, 8 : i32
    %411 = arith.index_cast %410 : i32 to index
    %c0_85 = arith.constant 0 : index
    %412 = vector.load %arg3[%411, %c0_85] : memref<64x96xf32, #tpu.memory_space<vmem>>, vector<8x96xf32>
    %413 = vector.extract_strided_slice %412 {offsets = [0, 0], sizes = [8, 64], strides = [1, 1]} : vector<8x96xf32> to vector<8x64xf32>
    %414 = vector.extract_strided_slice %405 {offsets = [0, 0], sizes = [8, 64], strides = [1, 1]} : vector<8x96xf32> to vector<8x64xf32>
    %415 = arith.addf %413, %414 : vector<8x64xf32>
    %416 = arith.addf %415, %18 : vector<8x64xf32>
    %cst_86 = arith.constant 5.000000e-01 : f32
    %417 = vector.broadcast %cst_86 : f32 to vector<8x64xf32>
    %418 = arith.mulf %417, %416 : vector<8x64xf32>
    %419 = math.tanh %418 : vector<8x64xf32>
    %cst_87 = arith.constant 5.000000e-01 : f32
    %420 = vector.broadcast %cst_87 : f32 to vector<8x64xf32>
    %421 = arith.mulf %420, %419 : vector<8x64xf32>
    %cst_88 = arith.constant 5.000000e-01 : f32
    %422 = vector.broadcast %cst_88 : f32 to vector<8x64xf32>
    %423 = arith.addf %421, %422 : vector<8x64xf32>
    %424 = vector.extract_strided_slice %412 {offsets = [0, 64], sizes = [8, 32], strides = [1, 1]} : vector<8x96xf32> to vector<8x32xf32>
    %425 = vector.extract_strided_slice %423 {offsets = [0, 0], sizes = [8, 32], strides = [1, 1]} : vector<8x64xf32> to vector<8x32xf32>
    %426 = vector.extract_strided_slice %405 {offsets = [0, 64], sizes = [8, 32], strides = [1, 1]} : vector<8x96xf32> to vector<8x32xf32>
    %427 = arith.addf %426, %21 : vector<8x32xf32>
    %428 = arith.mulf %425, %427 : vector<8x32xf32>
    %429 = arith.addf %424, %428 : vector<8x32xf32>
    %430 = math.tanh %429 : vector<8x32xf32>
    %431 = vector.extract_strided_slice %423 {offsets = [0, 32], sizes = [8, 32], strides = [1, 1]} : vector<8x64xf32> to vector<8x32xf32>
    %cst_89 = arith.constant 1.000000e+00 : f32
    %432 = vector.broadcast %cst_89 : f32 to vector<8x32xf32>
    %433 = arith.subf %432, %431 : vector<8x32xf32>
    %434 = arith.mulf %433, %430 : vector<8x32xf32>
    %435 = vector.extract_strided_slice %423 {offsets = [0, 32], sizes = [8, 32], strides = [1, 1]} : vector<8x64xf32> to vector<8x32xf32>
    %436 = arith.mulf %435, %407 : vector<8x32xf32>
    %437 = arith.addf %434, %436 : vector<8x32xf32>
    %cst_90 = arith.constant dense<0.000000e+00> : vector<8x96xf32>
    %438 = tpu.matmul %437, %3, %cst_90 {dimension_numbers = #tpu.dot_dimension_numbers<[1], [0], [0], [1], [0, 0, 1, 1], [], []>} : vector<8x32xf32>, vector<32x96xf32>, vector<8x96xf32> -> vector<8x96xf32>
    %439 = vector.extract_strided_slice %438 {offsets = [0, 0], sizes = [8, 64], strides = [1, 1]} : vector<8x96xf32> to vector<8x64xf32>
    %440 = vector.extract_strided_slice %406 {offsets = [0, 0], sizes = [8, 64], strides = [1, 1]} : vector<8x96xf32> to vector<8x64xf32>
    %441 = arith.addf %439, %440 : vector<8x64xf32>
    %442 = arith.addf %441, %24 : vector<8x64xf32>
    %cst_91 = arith.constant 5.000000e-01 : f32
    %443 = vector.broadcast %cst_91 : f32 to vector<8x64xf32>
    %444 = arith.mulf %443, %442 : vector<8x64xf32>
    %445 = math.tanh %444 : vector<8x64xf32>
    %cst_92 = arith.constant 5.000000e-01 : f32
    %446 = vector.broadcast %cst_92 : f32 to vector<8x64xf32>
    %447 = arith.mulf %446, %445 : vector<8x64xf32>
    %cst_93 = arith.constant 5.000000e-01 : f32
    %448 = vector.broadcast %cst_93 : f32 to vector<8x64xf32>
    %449 = arith.addf %447, %448 : vector<8x64xf32>
    %450 = vector.extract_strided_slice %438 {offsets = [0, 64], sizes = [8, 32], strides = [1, 1]} : vector<8x96xf32> to vector<8x32xf32>
    %451 = arith.addf %450, %27 : vector<8x32xf32>
    %452 = vector.extract_strided_slice %449 {offsets = [0, 0], sizes = [8, 32], strides = [1, 1]} : vector<8x64xf32> to vector<8x32xf32>
    %453 = vector.extract_strided_slice %406 {offsets = [0, 64], sizes = [8, 32], strides = [1, 1]} : vector<8x96xf32> to vector<8x32xf32>
    %454 = arith.addf %453, %30 : vector<8x32xf32>
    %455 = arith.mulf %452, %454 : vector<8x32xf32>
    %456 = arith.addf %451, %455 : vector<8x32xf32>
    %457 = math.tanh %456 : vector<8x32xf32>
    %458 = vector.extract_strided_slice %449 {offsets = [0, 32], sizes = [8, 32], strides = [1, 1]} : vector<8x64xf32> to vector<8x32xf32>
    %cst_94 = arith.constant 1.000000e+00 : f32
    %459 = vector.broadcast %cst_94 : f32 to vector<8x32xf32>
    %460 = arith.subf %459, %458 : vector<8x32xf32>
    %461 = arith.mulf %460, %457 : vector<8x32xf32>
    %462 = vector.extract_strided_slice %449 {offsets = [0, 32], sizes = [8, 32], strides = [1, 1]} : vector<8x64xf32> to vector<8x32xf32>
    %463 = arith.mulf %462, %408 : vector<8x32xf32>
    %464 = arith.addf %461, %463 : vector<8x32xf32>
    %465 = tpu.concatenate %437, %464 in 1 : vector<8x32xf32>, vector<8x32xf32> -> vector<8x64xf32>
    %c7_i32 = arith.constant 7 : i32
    %cst_95 = arith.constant dense<0.000000e+00> : vector<8x256xf32>
    %466 = tpu.matmul %465, %1, %cst_95 {dimension_numbers = #tpu.dot_dimension_numbers<[1], [0], [0], [1], [0, 0, 1, 1], [], []>} : vector<8x64xf32>, vector<64x256xf32>, vector<8x256xf32> -> vector<8x256xf32>
    %467 = vector.extract_strided_slice %466 {offsets = [0, 0], sizes = [8, 96], strides = [1, 1]} : vector<8x256xf32> to vector<8x96xf32>
    %468 = vector.extract_strided_slice %466 {offsets = [0, 96], sizes = [8, 96], strides = [1, 1]} : vector<8x256xf32> to vector<8x96xf32>
    %469 = vector.extract_strided_slice %465 {offsets = [0, 0], sizes = [8, 32], strides = [1, 1]} : vector<8x64xf32> to vector<8x32xf32>
    %470 = vector.extract_strided_slice %465 {offsets = [0, 32], sizes = [8, 32], strides = [1, 1]} : vector<8x64xf32> to vector<8x32xf32>
    %c8_i32_96 = arith.constant 8 : i32
    %471 = arith.muli %c7_i32, %c8_i32_96 : i32
    %472 = tpu.assume_multiple %471, 8 : i32
    %473 = arith.index_cast %472 : i32 to index
    %c0_97 = arith.constant 0 : index
    %474 = vector.load %arg3[%473, %c0_97] : memref<64x96xf32, #tpu.memory_space<vmem>>, vector<8x96xf32>
    %475 = vector.extract_strided_slice %474 {offsets = [0, 0], sizes = [8, 64], strides = [1, 1]} : vector<8x96xf32> to vector<8x64xf32>
    %476 = vector.extract_strided_slice %467 {offsets = [0, 0], sizes = [8, 64], strides = [1, 1]} : vector<8x96xf32> to vector<8x64xf32>
    %477 = arith.addf %475, %476 : vector<8x64xf32>
    %478 = arith.addf %477, %18 : vector<8x64xf32>
    %cst_98 = arith.constant 5.000000e-01 : f32
    %479 = vector.broadcast %cst_98 : f32 to vector<8x64xf32>
    %480 = arith.mulf %479, %478 : vector<8x64xf32>
    %481 = math.tanh %480 : vector<8x64xf32>
    %cst_99 = arith.constant 5.000000e-01 : f32
    %482 = vector.broadcast %cst_99 : f32 to vector<8x64xf32>
    %483 = arith.mulf %482, %481 : vector<8x64xf32>
    %cst_100 = arith.constant 5.000000e-01 : f32
    %484 = vector.broadcast %cst_100 : f32 to vector<8x64xf32>
    %485 = arith.addf %483, %484 : vector<8x64xf32>
    %486 = vector.extract_strided_slice %474 {offsets = [0, 64], sizes = [8, 32], strides = [1, 1]} : vector<8x96xf32> to vector<8x32xf32>
    %487 = vector.extract_strided_slice %485 {offsets = [0, 0], sizes = [8, 32], strides = [1, 1]} : vector<8x64xf32> to vector<8x32xf32>
    %488 = vector.extract_strided_slice %467 {offsets = [0, 64], sizes = [8, 32], strides = [1, 1]} : vector<8x96xf32> to vector<8x32xf32>
    %489 = arith.addf %488, %21 : vector<8x32xf32>
    %490 = arith.mulf %487, %489 : vector<8x32xf32>
    %491 = arith.addf %486, %490 : vector<8x32xf32>
    %492 = math.tanh %491 : vector<8x32xf32>
    %493 = vector.extract_strided_slice %485 {offsets = [0, 32], sizes = [8, 32], strides = [1, 1]} : vector<8x64xf32> to vector<8x32xf32>
    %cst_101 = arith.constant 1.000000e+00 : f32
    %494 = vector.broadcast %cst_101 : f32 to vector<8x32xf32>
    %495 = arith.subf %494, %493 : vector<8x32xf32>
    %496 = arith.mulf %495, %492 : vector<8x32xf32>
    %497 = vector.extract_strided_slice %485 {offsets = [0, 32], sizes = [8, 32], strides = [1, 1]} : vector<8x64xf32> to vector<8x32xf32>
    %498 = arith.mulf %497, %469 : vector<8x32xf32>
    %499 = arith.addf %496, %498 : vector<8x32xf32>
    %cst_102 = arith.constant dense<0.000000e+00> : vector<8x96xf32>
    %500 = tpu.matmul %499, %3, %cst_102 {dimension_numbers = #tpu.dot_dimension_numbers<[1], [0], [0], [1], [0, 0, 1, 1], [], []>} : vector<8x32xf32>, vector<32x96xf32>, vector<8x96xf32> -> vector<8x96xf32>
    %501 = vector.extract_strided_slice %500 {offsets = [0, 0], sizes = [8, 64], strides = [1, 1]} : vector<8x96xf32> to vector<8x64xf32>
    %502 = vector.extract_strided_slice %468 {offsets = [0, 0], sizes = [8, 64], strides = [1, 1]} : vector<8x96xf32> to vector<8x64xf32>
    %503 = arith.addf %501, %502 : vector<8x64xf32>
    %504 = arith.addf %503, %24 : vector<8x64xf32>
    %cst_103 = arith.constant 5.000000e-01 : f32
    %505 = vector.broadcast %cst_103 : f32 to vector<8x64xf32>
    %506 = arith.mulf %505, %504 : vector<8x64xf32>
    %507 = math.tanh %506 : vector<8x64xf32>
    %cst_104 = arith.constant 5.000000e-01 : f32
    %508 = vector.broadcast %cst_104 : f32 to vector<8x64xf32>
    %509 = arith.mulf %508, %507 : vector<8x64xf32>
    %cst_105 = arith.constant 5.000000e-01 : f32
    %510 = vector.broadcast %cst_105 : f32 to vector<8x64xf32>
    %511 = arith.addf %509, %510 : vector<8x64xf32>
    %512 = vector.extract_strided_slice %500 {offsets = [0, 64], sizes = [8, 32], strides = [1, 1]} : vector<8x96xf32> to vector<8x32xf32>
    %513 = arith.addf %512, %27 : vector<8x32xf32>
    %514 = vector.extract_strided_slice %511 {offsets = [0, 0], sizes = [8, 32], strides = [1, 1]} : vector<8x64xf32> to vector<8x32xf32>
    %515 = vector.extract_strided_slice %468 {offsets = [0, 64], sizes = [8, 32], strides = [1, 1]} : vector<8x96xf32> to vector<8x32xf32>
    %516 = arith.addf %515, %30 : vector<8x32xf32>
    %517 = arith.mulf %514, %516 : vector<8x32xf32>
    %518 = arith.addf %513, %517 : vector<8x32xf32>
    %519 = math.tanh %518 : vector<8x32xf32>
    %520 = vector.extract_strided_slice %511 {offsets = [0, 32], sizes = [8, 32], strides = [1, 1]} : vector<8x64xf32> to vector<8x32xf32>
    %cst_106 = arith.constant 1.000000e+00 : f32
    %521 = vector.broadcast %cst_106 : f32 to vector<8x32xf32>
    %522 = arith.subf %521, %520 : vector<8x32xf32>
    %523 = arith.mulf %522, %519 : vector<8x32xf32>
    %524 = vector.extract_strided_slice %511 {offsets = [0, 32], sizes = [8, 32], strides = [1, 1]} : vector<8x64xf32> to vector<8x32xf32>
    %525 = arith.mulf %524, %470 : vector<8x32xf32>
    %526 = arith.addf %523, %525 : vector<8x32xf32>
    %527 = tpu.concatenate %499, %526 in 1 : vector<8x32xf32>, vector<8x32xf32> -> vector<8x64xf32>
    %c8_i32_107 = arith.constant 8 : i32
    %528 = vector.extract_strided_slice %527 {offsets = [0, 32], sizes = [8, 32], strides = [1, 1]} : vector<8x64xf32> to vector<8x32xf32>
    %c64 = arith.constant 64 : index
    %c0_108 = arith.constant 0 : index
    %529 = vector.load %arg0[%c64, %c0_108] : memref<72x128xf32, #tpu.memory_space<vmem>>, vector<8x128xf32>
    %530 = vector.extract_strided_slice %529 {offsets = [0, 0], sizes = [8, 24], strides = [1, 1]} : vector<8x128xf32> to vector<8x24xf32>
    %cst_109 = arith.constant dense<0.000000e+00> : vector<8x256xf32>
    %531 = tpu.matmul %530, %5, %cst_109 {dimension_numbers = #tpu.dot_dimension_numbers<[1], [0], [0], [1], [0, 0, 1, 1], [], []>} : vector<8x24xf32>, vector<24x256xf32>, vector<8x256xf32> -> vector<8x256xf32>
    %532 = vector.extract_strided_slice %7 {offsets = [0, 0], sizes = [1, 256], strides = [1, 1]} : vector<8x256xf32> to vector<1x256xf32>
    %533 = vector.broadcast %532 : vector<1x256xf32> to vector<8x256xf32>
    %534 = arith.addf %531, %533 : vector<8x256xf32>
    %535 = vector.extract_strided_slice %534 {offsets = [0, 0], sizes = [8, 128], strides = [1, 1]} : vector<8x256xf32> to vector<8x128xf32>
    %536 = vector.extract_strided_slice %534 {offsets = [0, 128], sizes = [8, 128], strides = [1, 1]} : vector<8x256xf32> to vector<8x128xf32>
    %cst_110 = arith.constant dense<0.000000e+00> : vector<8x8xf32>
    %537 = tpu.matmul %535, %536, %cst_110 {dimension_numbers = #tpu.dot_dimension_numbers<[1], [1], [0], [0], [0, 0, 1, 0], [], []>} : vector<8x128xf32>, vector<8x128xf32>, vector<8x8xf32> -> vector<8x8xf32>
    %cst_111 = arith.constant 2.500000e-01 : f32
    %538 = vector.broadcast %cst_111 : f32 to vector<8x8xf32>
    %539 = arith.mulf %537, %538 : vector<8x8xf32>
    %cst_112 = arith.constant dense<0xFF800000> : vector<8xf32>
    %540 = vector.multi_reduction <maximumf>, %539, %cst_112 [1] : vector<8x8xf32> to vector<8xf32>
    %541 = vector.shape_cast %540 : vector<8xf32> to vector<8x1xf32>
    %542 = vector.broadcast %541 : vector<8x1xf32> to vector<8x8xf32>
    %543 = arith.subf %539, %542 : vector<8x8xf32>
    %544 = math.exp %543 : vector<8x8xf32>
    %cst_113 = arith.constant dense<0.000000e+00> : vector<8xf32>
    %545 = vector.multi_reduction <add>, %544, %cst_113 [1] : vector<8x8xf32> to vector<8xf32>
    %546 = vector.shape_cast %545 : vector<8xf32> to vector<8x1xf32>
    %547 = tpu.reciprocal %546 {approx = true} : vector<8x1xf32> -> vector<8x1xf32>
    %548 = vector.broadcast %547 : vector<8x1xf32> to vector<8x8xf32>
    %549 = arith.mulf %544, %548 : vector<8x8xf32>
    %550 = vector.extract_strided_slice %6 {offsets = [0, 0], sizes = [32, 64], strides = [1, 1]} : vector<32x256xf32> to vector<32x64xf32>
    %cst_114 = arith.constant dense<0.000000e+00> : vector<8x64xf32>
    %551 = tpu.matmul %528, %550, %cst_114 {dimension_numbers = #tpu.dot_dimension_numbers<[1], [0], [0], [1], [0, 0, 1, 1], [], []>} : vector<8x32xf32>, vector<32x64xf32>, vector<8x64xf32> -> vector<8x64xf32>
    %552 = vector.extract_strided_slice %551 {offsets = [0, 0], sizes = [8, 32], strides = [1, 1]} : vector<8x64xf32> to vector<8x32xf32>
    %553 = vector.extract_strided_slice %7 {offsets = [1, 0], sizes = [1, 32], strides = [1, 1]} : vector<8x256xf32> to vector<1x32xf32>
    %554 = vector.broadcast %553 : vector<1x32xf32> to vector<8x32xf32>
    %555 = arith.addf %552, %554 : vector<8x32xf32>
    %cst_115 = arith.constant dense<0.000000e+00> : vector<8x32xf32>
    %556 = tpu.matmul %549, %555, %cst_115 {dimension_numbers = #tpu.dot_dimension_numbers<[1], [0], [0], [1], [0, 0, 1, 1], [], []>} : vector<8x8xf32>, vector<8x32xf32>, vector<8x32xf32> -> vector<8x32xf32>
    %557 = vector.extract_strided_slice %551 {offsets = [0, 32], sizes = [8, 32], strides = [1, 1]} : vector<8x64xf32> to vector<8x32xf32>
    %558 = vector.extract_strided_slice %6 {offsets = [0, 64], sizes = [32, 32], strides = [1, 1]} : vector<32x256xf32> to vector<32x32xf32>
    %cst_116 = arith.constant dense<0.000000e+00> : vector<8x32xf32>
    %559 = tpu.matmul %556, %558, %cst_116 {dimension_numbers = #tpu.dot_dimension_numbers<[1], [0], [0], [1], [0, 0, 1, 1], [], []>} : vector<8x32xf32>, vector<32x32xf32>, vector<8x32xf32> -> vector<8x32xf32>
    %560 = arith.addf %557, %559 : vector<8x32xf32>
    %561 = vector.extract_strided_slice %7 {offsets = [2, 0], sizes = [1, 32], strides = [1, 1]} : vector<8x256xf32> to vector<1x32xf32>
    %562 = vector.broadcast %561 : vector<1x32xf32> to vector<8x32xf32>
    %563 = arith.addf %560, %562 : vector<8x32xf32>
    %cst_117 = arith.constant 0.000000e+00 : f32
    %564 = vector.broadcast %cst_117 : f32 to vector<8x32xf32>
    %565 = arith.cmpf oge, %563, %564 : vector<8x32xf32>
    %cst_118 = arith.constant 0.00999999977 : f32
    %566 = vector.broadcast %cst_118 : f32 to vector<8x32xf32>
    %567 = arith.mulf %566, %563 : vector<8x32xf32>
    %568 = arith.select %565, %563, %567 : vector<8x32xi1>, vector<8x32xf32>
    %569 = vector.extract_strided_slice %7 {offsets = [3, 0], sizes = [1, 32], strides = [1, 1]} : vector<8x256xf32> to vector<1x32xf32>
    %570 = vector.broadcast %569 : vector<1x32xf32> to vector<8x32xf32>
    %571 = arith.mulf %568, %570 : vector<8x32xf32>
    %572 = vector.extract_strided_slice %7 {offsets = [4, 0], sizes = [1, 32], strides = [1, 1]} : vector<8x256xf32> to vector<1x32xf32>
    %573 = vector.broadcast %572 : vector<1x32xf32> to vector<8x32xf32>
    %574 = arith.addf %571, %573 : vector<8x32xf32>
    %575 = vector.extract_strided_slice %6 {offsets = [0, 96], sizes = [32, 1], strides = [1, 1]} : vector<32x256xf32> to vector<32x1xf32>
    %cst_119 = arith.constant dense<0.000000e+00> : vector<8x1xf32>
    %576 = tpu.matmul %574, %575, %cst_119 {dimension_numbers = #tpu.dot_dimension_numbers<[1], [0], [0], [1], [0, 0, 1, 1], [], []>} : vector<8x32xf32>, vector<32x1xf32>, vector<8x1xf32> -> vector<8x1xf32>
    %577 = vector.extract_strided_slice %7 {offsets = [5, 0], sizes = [1, 1], strides = [1, 1]} : vector<8x256xf32> to vector<1x1xf32>
    %578 = vector.broadcast %577 : vector<1x1xf32> to vector<8x1xf32>
    %579 = arith.addf %576, %578 : vector<8x1xf32>
    %c0_120 = arith.constant 0 : index
    %c0_121 = arith.constant 0 : index
    %580 = vector.load %arg2[%c0_120, %c0_121] : memref<8x1xf32, #tpu.memory_space<vmem>>, vector<8x1xf32>
    tpu.vector_store %arg2[%c0_120, %c0_121], %579 {strides = array<i32>} : memref<8x1xf32, #tpu.memory_space<vmem>>, vector<8x1xf32>,
    return
  }
}

</mosaic_0001>

<llo_original>
// kernel: risk_att_gru_forward.1
$region0: #{risk_att_gru_forward.1}
  #allocation0 [shape = 'u32[]', space=smem, size = 0x4, offset = 0x4, fixed_abs, tag = 'smem constant byte address 0x4 - core index']
  #allocation1 [shape = 'u32[72,128]{1,0:T(1,128)}', space=vmem, size = 0x9000, scoped, tag = 'internal scratch']
  #allocation2 [shape = 'f32[64,96]{1,0:T(8,128)}', space=vmem, size = 0x8000, scoped, tag = 'scratch operand']
  %s0 = inlined_call_operand.vmem [shape: f32[72,128], index: 0, kind: input, shape index: {}]
  %s1 = inlined_call_operand.hbm [shape: f32[176,256], index: 1, kind: input, shape index: {}]
  %s2 = inlined_call_operand.vmem [shape: f32[8,1], index: 2, kind: output, shape index: {}]
  %s3 = sld [smem:[#allocation0]]
  $region22: #{risk_att_gru_forward.1} parent=0
    _
  %s5 = ssub.s32 1, %s3
  %s6 = scalar_select 0, %s5, %s3
  $region1: #{risk_att_gru_forward.1} parent=0
    #allocation3 [shape = 'u8[180224]{0}', space=vmem, size = 0x2c000, scoped, tag = 'input window, operand 1, single buffered']
    #allocation4 [shape = 's32[1]{0}', space=sflag, size = 0x4, scoped, tag = 'scoped memory for risk_att_gru_forward.1']
    %7 = vsyncpa [#allocation4], 0
    // Predicated region
    $region2: #{risk_att_gru_forward.1} parent=1 // pred_check
      _
    $region3: #{risk_att_gru_forward.1} parent=1 // pred_check_branch
      %9 = sbr.rel (0) target = $region5
    $region4: #{risk_att_gru_forward.1} parent=1 // pred_region
      _
    $region5: #{risk_att_gru_forward.1} parent=1 // pred_fallthru
      _
    // Predicated region
    $region6: #{risk_att_gru_forward.1} parent=1 // pred_check
      _
    $region7: #{risk_att_gru_forward.1} parent=1 // pred_check_branch
      %11 = sbr.rel (0) target = $region9
    $region8: #{risk_att_gru_forward.1} parent=1 // pred_region
      %13 = vsyncadd [#allocation4], 0
      %s14 = sshll.u32 %s1, 4
      %s15 = int_to_ptr.hbm [resolvable:$true] %s14
      %s16 = sshll.u32 [#allocation3], 4
      %s17 = int_to_ptr.vmem [resolvable:$true] %s16
      %22 = dma.hbm_to_vmem [thread:$0]  %s15, 5632, %s17, [#allocation4], 256, 256, 16
    $region9: #{risk_att_gru_forward.1} parent=1 // pred_fallthru
      _
    // Predicated region
    $region10: #{risk_att_gru_forward.1} parent=1 // pred_check
      _
    $region11: #{risk_att_gru_forward.1} parent=1 // pred_check_branch
      %24 = sbr.rel (0) target = $region13
    $region12: #{risk_att_gru_forward.1} parent=1 // pred_region
      %26 = dma.done [#allocation4], 5632
    $region13: #{risk_att_gru_forward.1} parent=1 // pred_fallthru
      _
    %v27 = vld [vmem:[#allocation3] sm:$0xff]
    %v28 = vld [vmem:[#allocation3 + $0x10] sm:$0xff]
    %v29 = vld [vmem:[#allocation3 + $0x18] sm:$0xff]
    %v30 = vld [vmem:[#allocation3 + $0x20] sm:$0xff]
    %v31 = vld [vmem:[#allocation3 + $0x28] sm:$0xff]
    %v32 = vld [vmem:[#allocation3 + $0x30] sm:$0xff]
    %v33 = vld [vmem:[#allocation3 + $0x38] sm:$0xff]
    %v34 = vld [vmem:[#allocation3 + $0x40] sm:$0xff]
    %v35 = vld [vmem:[#allocation3 + $0x48] sm:$0xff]
    %v36 = vld [vmem:[#allocation3 + $0x50] sm:$0xff]
    %v37 = vld [vmem:[#allocation3 + $0x58] sm:$0xff]
    %v38 = vld [vmem:[#allocation3 + $0x60] sm:$0xff]
    %v39 = vld [vmem:[#allocation3 + $0x68] sm:$0xff]
    %v40 = vld [vmem:[#allocation3 + $0x70] sm:$0xff]
    %v41 = vld [vmem:[#allocation3 + $0x78] sm:$0xff]
    %v42 = vld [vmem:[#allocation3 + $0x80] sm:$0xff]
    %v43 = vld [vmem:[#allocation3 + $0x88] sm:$0xff]
    %v44 = vld [vmem:[#allocation3 + $0x90] sm:$0xff]
    %v45 = vld [vmem:[#allocation3 + $0xa0] sm:$0xff]
    %v46 = vld [vmem:[#allocation3 + $0xb0] sm:$0xff]
    %v47 = vld [vmem:[#allocation3 + $0xc0] sm:$0xff]
    %v48 = vld [vmem:[#allocation3 + $0xd0] sm:$0xff]
    %v49 = vld [vmem:[#allocation3 + $0xe0] sm:$0xff]
    %v50 = vld [vmem:[#allocation3 + $0xe8] sm:$0xff]
    %v51 = vld [vmem:[#allocation3 + $0xf0] sm:$0xff]
    %v52 = vld [vmem:[#allocation3 + $0xf8] sm:$0xff]
    %v53 = vld [vmem:[#allocation3 + $0x100] sm:$0xff]
    %v54 = vld [vmem:[#allocation3 + $0x108] sm:$0xff]
    %v55 = vld [vmem:[#allocation3 + $0x110] sm:$0xff]
    %v56 = vld [vmem:[#allocation3 + $0x120] sm:$0xff]
    %v57 = vld [vmem:[#allocation3 + $0x130] sm:$0xff]
    %v58 = vld [vmem:[#allocation3 + $0x140] sm:$0xff]
    %v59 = vld [vmem:[#allocation3 + $0x150] sm:$0xff]
    %v60 = vld [vmem:[#allocation3 + $0x158] sm:$0xff]
    %v61 = vld [vmem:[%s0] sm:$0xff]
    %v62 = vld [vmem:[%s0 + $0x8] sm:$0xff]
    %v63 = vld [vmem:[%s0 + $0x10] sm:$0xff]
    %v64 = vld [vmem:[%s0 + $0x18] sm:$0xff]
    %v65 = vld [vmem:[%s0 + $0x20] sm:$0xff]
    %v66 = vld [vmem:[%s0 + $0x28] sm:$0xff]
    %v67 = vld [vmem:[%s0 + $0x30] sm:$0xff]
    %v68 = vld [vmem:[%s0 + $0x38] sm:$0xff]
    %v69 = vperm.slane %v48, 0
    %vm70 = vcmask 64512
    %v72 = vsel %vm70, %v61, 0
    %v75 = vsel %vm70, %v62, 0
    %v78 = vsel %vm70, %v63, 0
    %v81 = vsel %vm70, %v64, 0
    %v84 = vsel %vm70, %v65, 0
    %v87 = vsel %vm70, %v66, 0
    %v90 = vsel %vm70, %v67, 0
    %v93 = vsel %vm70, %v68, 0
    %95 = vmatpush.msra.mxu0 0.0
    %96 = vmatpush.msra.mxu0 0.0
    %97 = vmatpush.msra.mxu0 0.0
    %98 = vmatpush.msra.mxu0 0.0
    %99 = vmatpush.msra.mxu0 0.0
    %100 = vmatpush.msra.mxu0 0.0
    %101 = vmatpush.msra.mxu0 0.0
    %102 = vmatpush.msra.mxu0 0.0
    %103 = vmatpush.msra.mxu0 0.0
    %104 = vmatpush.msra.mxu0 0.0
    %105 = vmatpush.msra.mxu0 0.0
    %106 = vmatpush.msra.mxu0 0.0
    %107 = vmatpush.msra.mxu0 0.0
    %108 = vmatpush.msra.mxu0 0.0
    %109 = vmatpush.msra.mxu0 0.0
    %110 = vmatpush.msra.mxu0 %v27
    %111 = vmatmul.f32.gmra.mxu0 %v72
    %v112 = vpop.f32.mrf.mxu0
    %v113 = vadd.f32 %v69, %v112
    %114 = vmatmul.f32.gmra.mxu0 %v75
    %v115 = vpop.f32.mrf.mxu0
    %v116 = vadd.f32 %v69, %v115
    %117 = vmatmul.f32.gmra.mxu0 %v78
    %v118 = vpop.f32.mrf.mxu0
    %v119 = vadd.f32 %v69, %v118
    %120 = vmatmul.f32.gmra.mxu0 %v81
    %v121 = vpop.f32.mrf.mxu0
    %v122 = vadd.f32 %v69, %v121
    %123 = vmatmul.f32.gmra.mxu0 %v84
    %v124 = vpop.f32.mrf.mxu0
    %v125 = vadd.f32 %v69, %v124
    %126 = vmatmul.f32.gmra.mxu0 %v87
    %v127 = vpop.f32.mrf.mxu0
    %v128 = vadd.f32 %v69, %v127
    %129 = vmatmul.f32.gmra.mxu0 %v90
    %v130 = vpop.f32.mrf.mxu0
    %v131 = vadd.f32 %v69, %v130
    %132 = vmatmul.f32.gmra.mxu0 %v93
    %v133 = vpop.f32.mrf.mxu0
    %v134 = vadd.f32 %v69, %v133
    %135 = vdwg.mxu0
    %vm136 = vcmask 785408
    %137 = vst.msk [vmem:[#allocation2] sm:$0xff] %vm136, %v113
    %138 = vst.msk [vmem:[#allocation2 + $0x8] sm:$0xff] %vm136, %v116
    %139 = vst.msk [vmem:[#allocation2 + $0x10] sm:$0xff] %vm136, %v119
    %140 = vst.msk [vmem:[#allocation2 + $0x18] sm:$0xff] %vm136, %v122
    %141 = vst.msk [vmem:[#allocation2 + $0x20] sm:$0xff] %vm136, %v125
    %142 = vst.msk [vmem:[#allocation2 + $0x28] sm:$0xff] %vm136, %v128
    %143 = vst.msk [vmem:[#allocation2 + $0x30] sm:$0xff] %vm136, %v131
    %144 = vst.msk [vmem:[#allocation2 + $0x38] sm:$0xff] %vm136, %v134
    %v145 = vperm.slane %v48, 1
    %v146 = vperm.slane %v48, 2
    %v147 = vperm.slane %v48, 3
    %v148 = vperm.slane %v48, 4
    %v149 = vperm.slane %v48, 5
    %vm150 = vcmask 523264
    %v152 = vsel %vm150, 0.0, 0
    %154 = vmatpush.msra.mxu0 0.0
    %155 = vmatpush.msra.mxu0 0.0
    %156 = vmatpush.msra.mxu0 0.0
    %157 = vmatpush.msra.mxu0 0.0
    %158 = vmatpush.msra.mxu0 0.0
    %159 = vmatpush.msra.mxu0 0.0
    %160 = vmatpush.msra.mxu0 0.0
    %161 = vmatpush.msra.mxu0 0.0
    %162 = vmatpush.msra.mxu0 %v42
    %163 = vmatpush.msra.mxu0 %v40
    %164 = vmatpush.msra.mxu0 %v38
    %165 = vmatpush.msra.mxu0 %v36
    %166 = vmatpush.msra.mxu0 %v34
    %167 = vmatpush.msra.mxu0 %v32
    %168 = vmatpush.msra.mxu0 %v30
    %169 = vmatpush.msra.mxu0 %v28
    %170 = vmatmul.f32.gmra.mxu0 %v152
    %v171 = vpop.f32.mrf.mxu0
    %v172 = vadd.f32 0.0, %v171
    %173 = vdwg.mxu0
    %174 = vmatpush.msra.mxu0 0.0
    %175 = vmatpush.msra.mxu0 0.0
    %176 = vmatpush.msra.mxu0 0.0
    %177 = vmatpush.msra.mxu0 0.0
    %178 = vmatpush.msra.mxu0 0.0
    %179 = vmatpush.msra.mxu0 0.0
    %180 = vmatpush.msra.mxu0 0.0
    %181 = vmatpush.msra.mxu0 0.0
    %182 = vmatpush.msra.mxu0 %v43
    %183 = vmatpush.msra.mxu0 %v41
    %184 = vmatpush.msra.mxu0 %v39
    %185 = vmatpush.msra.mxu0 %v37
    %186 = vmatpush.msra.mxu0 %v35
    %187 = vmatpush.msra.mxu0 %v33
    %188 = vmatpush.msra.mxu0 %v31
    %189 = vmatpush.msra.mxu0 %v29
    %190 = vmatmul.f32.gmra.mxu0 %v152
    %v191 = vpop.f32.mrf.mxu0
    %v192 = vadd.f32 0.0, %v191
    %193 = vdwg.mxu0
    %v194 = vld [vmem:[#allocation2] sm:$0xff]
    %v195 = vadd.f32 %v194, %v172
    %v196 = vadd.f32 %v195, %v145
    %v197 = vmul.f32 %v196, 0.5
    %v198 = vtanh.pop %v197
    %v199 = vmul.f32 %v198, 0.5
    %v200 = vadd.f32 %v199, 0.5
    %202 = vrot.lane.b32.xlu0 %v146, 64
    %v203 = vpop.permute.xlu0 %202
    %v205 = vadd.f32 %v172, %v203
    %207 = vrot.lane.b32.xlu0 %v205, 64
    %v208 = vpop.permute.xlu0 %207
    %v210 = vmul.f32 %v200, %v208
    %212 = vrot.lane.b32.xlu0 %v210, 64
    %v213 = vpop.permute.xlu0 %212
    %v215 = vadd.f32 %v194, %v213
    %v216 = vtanh.pop %v215
    %v217 = vsub.f32 1.0, %v200
    %219 = vrot.lane.b32.xlu0 %v216, 96
    %v220 = vpop.permute.xlu0 %219
    %v222 = vmul.f32 %v217, %v220
    %v223 = vmul.f32 %v200, 0.0
    %v224 = vadd.f32 %v222, %v223
    %226 = vrot.lane.b32.xlu0 %v224, 96
    %v227 = vpop.permute.xlu0 %226
    %vm228 = vcmask 261120
    %v229 = vsel %vm228, %v227, 0
    %231 = vmatpush.msra.mxu0 0.0
    %232 = vmatpush.msra.mxu0 0.0
    %233 = vmatpush.msra.mxu0 0.0
    %234 = vmatpush.msra.mxu0 0.0
    %235 = vmatpush.msra.mxu0 0.0
    %236 = vmatpush.msra.mxu0 0.0
    %237 = vmatpush.msra.mxu0 0.0
    %238 = vmatpush.msra.mxu0 0.0
    %239 = vmatpush.msra.mxu0 0.0
    %240 = vmatpush.msra.mxu0 0.0
    %241 = vmatpush.msra.mxu0 0.0
    %242 = vmatpush.msra.mxu0 0.0
    %243 = vmatpush.msra.mxu0 %v47
    %244 = vmatpush.msra.mxu0 %v46
    %245 = vmatpush.msra.mxu0 %v45
    %246 = vmatpush.msra.mxu0 %v44
    %247 = vmatmul.f32.gmra.mxu0 %v229
    %v248 = vpop.f32.mrf.mxu0
    %v249 = vadd.f32 0.0, %v248
    %250 = vdwg.mxu0
    %253 = vrot.lane.b32.xlu0 %v172, 32
    %v254 = vpop.permute.xlu0 %253
    %255 = vrot.lane.b32.xlu0 %v192, 32
    %v256 = vpop.permute.xlu0 %255
    %v257 = vsel %vm228, %v254, %v256
    %v259 = vadd.f32 %v249, %v257
    %v260 = vadd.f32 %v259, %v147
    %v261 = vmul.f32 %v260, 0.5
    %v262 = vtanh.pop %v261
    %v263 = vmul.f32 %v262, 0.5
    %v264 = vadd.f32 %v263, 0.5
    %266 = vrot.lane.b32.xlu0 %v148, 64
    %v267 = vpop.permute.xlu0 %266
    %v269 = vadd.f32 %v249, %v267
    %271 = vrot.lane.b32.xlu0 %v149, 32
    %v272 = vpop.permute.xlu0 %271
    %v274 = vadd.f32 %v192, %v272
    %276 = vrot.lane.b32.xlu0 %v274, 96
    %v277 = vpop.permute.xlu0 %276
    %v279 = vmul.f32 %v264, %v277
    %281 = vrot.lane.b32.xlu0 %v279, 64
    %v282 = vpop.permute.xlu0 %281
    %v284 = vadd.f32 %v269, %v282
    %v285 = vtanh.pop %v284
    %v286 = vsub.f32 1.0, %v264
    %288 = vrot.lane.b32.xlu0 %v285, 96
    %v289 = vpop.permute.xlu0 %288
    %v291 = vmul.f32 %v286, %v289
    %v292 = vmul.f32 %v264, 0.0
    %v293 = vadd.f32 %v291, %v292
    %v295 = vsel %vm228, %v227, %v293
    %v297 = vsel %vm150, %v295, 0
    %299 = vmatpush.msra.mxu0 0.0
    %300 = vmatpush.msra.mxu0 0.0
    %301 = vmatpush.msra.mxu0 0.0
    %302 = vmatpush.msra.mxu0 0.0
    %303 = vmatpush.msra.mxu0 0.0
    %304 = vmatpush.msra.mxu0 0.0
    %305 = vmatpush.msra.mxu0 0.0
    %306 = vmatpush.msra.mxu0 0.0
    %307 = vmatpush.msra.mxu0 %v42
    %308 = vmatpush.msra.mxu0 %v40
    %309 = vmatpush.msra.mxu0 %v38
    %310 = vmatpush.msra.mxu0 %v36
    %311 = vmatpush.msra.mxu0 %v34
    %312 = vmatpush.msra.mxu0 %v32
    %313 = vmatpush.msra.mxu0 %v30
    %314 = vmatpush.msra.mxu0 %v28
    %315 = vmatmul.f32.gmra.mxu0 %v297
    %v316 = vpop.f32.mrf.mxu0
    %v317 = vadd.f32 0.0, %v316
    %318 = vdwg.mxu0
    %319 = vmatpush.msra.mxu0 0.0
    %320 = vmatpush.msra.mxu0 0.0
    %321 = vmatpush.msra.mxu0 0.0
    %322 = vmatpush.msra.mxu0 0.0
    %323 = vmatpush.msra.mxu0 0.0
    %324 = vmatpush.msra.mxu0 0.0
    %325 = vmatpush.msra.mxu0 0.0
    %326 = vmatpush.msra.mxu0 0.0
    %327 = vmatpush.msra.mxu0 %v43
    %328 = vmatpush.msra.mxu0 %v41
    %329 = vmatpush.msra.mxu0 %v39
    %330 = vmatpush.msra.mxu0 %v37
    %331 = vmatpush.msra.mxu0 %v35
    %332 = vmatpush.msra.mxu0 %v33
    %333 = vmatpush.msra.mxu0 %v31
    %334 = vmatpush.msra.mxu0 %v29
    %335 = vmatmul.f32.gmra.mxu0 %v297
    %v336 = vpop.f32.mrf.mxu0
    %v337 = vadd.f32 0.0, %v336
    %338 = vdwg.mxu0
    %s339 = scalar_lea.vmem [#allocation2], 8
    %v340 = vld [vmem:[%s339] sm:$0xff]
    %v341 = vadd.f32 %v340, %v317
    %v342 = vadd.f32 %v341, %v145
    %v343 = vmul.f32 %v342, 0.5
    %v344 = vtanh.pop %v343
    %v345 = vmul.f32 %v344, 0.5
    %v346 = vadd.f32 %v345, 0.5
    %v347 = vadd.f32 %v317, %v203
    %349 = vrot.lane.b32.xlu0 %v347, 64
    %v350 = vpop.permute.xlu0 %349
    %v352 = vmul.f32 %v346, %v350
    %354 = vrot.lane.b32.xlu0 %v352, 64
    %v355 = vpop.permute.xlu0 %354
    %v357 = vadd.f32 %v340, %v355
    %v358 = vtanh.pop %v357
    %v359 = vsub.f32 1.0, %v346
    %361 = vrot.lane.b32.xlu0 %v358, 96
    %v362 = vpop.permute.xlu0 %361
    %v364 = vmul.f32 %v359, %v362
    %365 = vrot.lane.b32.xlu0 %v295, 32
    %v366 = vpop.permute.xlu0 %365
    %v368 = vmul.f32 %v346, %v366
    %v369 = vadd.f32 %v364, %v368
    %371 = vrot.lane.b32.xlu0 %v369, 96
    %v372 = vpop.permute.xlu0 %371
    %v373 = vsel %vm228, %v372, 0
    %375 = vmatpush.msra.mxu0 0.0
    %376 = vmatpush.msra.mxu0 0.0
    %377 = vmatpush.msra.mxu0 0.0
    %378 = vmatpush.msra.mxu0 0.0
    %379 = vmatpush.msra.mxu0 0.0
    %380 = vmatpush.msra.mxu0 0.0
    %381 = vmatpush.msra.mxu0 0.0
    %382 = vmatpush.msra.mxu0 0.0
    %383 = vmatpush.msra.mxu0 0.0
    %384 = vmatpush.msra.mxu0 0.0
    %385 = vmatpush.msra.mxu0 0.0
    %386 = vmatpush.msra.mxu0 0.0
    %387 = vmatpush.msra.mxu0 %v47
    %388 = vmatpush.msra.mxu0 %v46
    %389 = vmatpush.msra.mxu0 %v45
    %390 = vmatpush.msra.mxu0 %v44
    %391 = vmatmul.f32.gmra.mxu0 %v373
    %v392 = vpop.f32.mrf.mxu0
    %v393 = vadd.f32 0.0, %v392
    %394 = vdwg.mxu0
    %397 = vrot.lane.b32.xlu0 %v317, 32
    %v398 = vpop.permute.xlu0 %397
    %399 = vrot.lane.b32.xlu0 %v337, 32
    %v400 = vpop.permute.xlu0 %399
    %v401 = vsel %vm228, %v398, %v400
    %v403 = vadd.f32 %v393, %v401
    %v404 = vadd.f32 %v403, %v147
    %v405 = vmul.f32 %v404, 0.5
    %v406 = vtanh.pop %v405
    %v407 = vmul.f32 %v406, 0.5
    %v408 = vadd.f32 %v407, 0.5
    %v409 = vadd.f32 %v393, %v267
    %v410 = vadd.f32 %v337, %v272
    %412 = vrot.lane.b32.xlu0 %v410, 96
    %v413 = vpop.permute.xlu0 %412
    %v415 = vmul.f32 %v408, %v413
    %417 = vrot.lane.b32.xlu0 %v415, 64
    %v418 = vpop.permute.xlu0 %417
    %v420 = vadd.f32 %v409, %v418
    %v421 = vtanh.pop %v420
    %v422 = vsub.f32 1.0, %v408
    %424 = vrot.lane.b32.xlu0 %v421, 96
    %v425 = vpop.permute.xlu0 %424
    %v427 = vmul.f32 %v422, %v425
    %v428 = vmul.f32 %v408, %v295
    %v429 = vadd.f32 %v427, %v428
    %v431 = vsel %vm228, %v372, %v429
    %v433 = vsel %vm150, %v431, 0
    %435 = vmatpush.msra.mxu0 0.0
    %436 = vmatpush.msra.mxu0 0.0
    %437 = vmatpush.msra.mxu0 0.0
    %438 = vmatpush.msra.mxu0 0.0
    %439 = vmatpush.msra.mxu0 0.0
    %440 = vmatpush.msra.mxu0 0.0
    %441 = vmatpush.msra.mxu0 0.0
    %442 = vmatpush.msra.mxu0 0.0
    %443 = vmatpush.msra.mxu0 %v42
    %444 = vmatpush.msra.mxu0 %v40
    %445 = vmatpush.msra.mxu0 %v38
    %446 = vmatpush.msra.mxu0 %v36
    %447 = vmatpush.msra.mxu0 %v34
    %448 = vmatpush.msra.mxu0 %v32
    %449 = vmatpush.msra.mxu0 %v30
    %450 = vmatpush.msra.mxu0 %v28
    %451 = vmatmul.f32.gmra.mxu0 %v433
    %v452 = vpop.f32.mrf.mxu0
    %v453 = vadd.f32 0.0, %v452
    %454 = vdwg.mxu0
    %455 = vmatpush.msra.mxu0 0.0
    %456 = vmatpush.msra.mxu0 0.0
    %457 = vmatpush.msra.mxu0 0.0
    %458 = vmatpush.msra.mxu0 0.0
    %459 = vmatpush.msra.mxu0 0.0
    %460 = vmatpush.msra.mxu0 0.0
    %461 = vmatpush.msra.mxu0 0.0
    %462 = vmatpush.msra.mxu0 0.0
    %463 = vmatpush.msra.mxu0 %v43
    %464 = vmatpush.msra.mxu0 %v41
    %465 = vmatpush.msra.mxu0 %v39
    %466 = vmatpush.msra.mxu0 %v37
    %467 = vmatpush.msra.mxu0 %v35
    %468 = vmatpush.msra.mxu0 %v33
    %469 = vmatpush.msra.mxu0 %v31
    %470 = vmatpush.msra.mxu0 %v29
    %471 = vmatmul.f32.gmra.mxu0 %v433
    %v472 = vpop.f32.mrf.mxu0
    %v473 = vadd.f32 0.0, %v472
    %474 = vdwg.mxu0
    %s475 = scalar_lea.vmem [#allocation2], 16
    %v476 = vld [vmem:[%s475] sm:$0xff]
    %v477 = vadd.f32 %v476, %v453
    %v478 = vadd.f32 %v477, %v145
    %v479 = vmul.f32 %v478, 0.5
    %v480 = vtanh.pop %v479
    %v481 = vmul.f32 %v480, 0.5
    %v482 = vadd.f32 %v481, 0.5
    %v483 = vadd.f32 %v453, %v203
    %485 = vrot.lane.b32.xlu0 %v483, 64
    %v486 = vpop.permute.xlu0 %485
    %v488 = vmul.f32 %v482, %v486
    %490 = vrot.lane.b32.xlu0 %v488, 64
    %v491 = vpop.permute.xlu0 %490
    %v493 = vadd.f32 %v476, %v491
    %v494 = vtanh.pop %v493
    %v495 = vsub.f32 1.0, %v482
    %497 = vrot.lane.b32.xlu0 %v494, 96
    %v498 = vpop.permute.xlu0 %497
    %v500 = vmul.f32 %v495, %v498
    %501 = vrot.lane.b32.xlu0 %v431, 32
    %v502 = vpop.permute.xlu0 %501
    %v504 = vmul.f32 %v482, %v502
    %v505 = vadd.f32 %v500, %v504
    %507 = vrot.lane.b32.xlu0 %v505, 96
    %v508 = vpop.permute.xlu0 %507
    %v509 = vsel %vm228, %v508, 0
    %511 = vmatpush.msra.mxu0 0.0
    %512 = vmatpush.msra.mxu0 0.0
    %513 = vmatpush.msra.mxu0 0.0
    %514 = vmatpush.msra.mxu0 0.0
    %515 = vmatpush.msra.mxu0 0.0
    %516 = vmatpush.msra.mxu0 0.0
    %517 = vmatpush.msra.mxu0 0.0
    %518 = vmatpush.msra.mxu0 0.0
    %519 = vmatpush.msra.mxu0 0.0
    %520 = vmatpush.msra.mxu0 0.0
    %521 = vmatpush.msra.mxu0 0.0
    %522 = vmatpush.msra.mxu0 0.0
    %523 = vmatpush.msra.mxu0 %v47
    %524 = vmatpush.msra.mxu0 %v46
    %525 = vmatpush.msra.mxu0 %v45
    %526 = vmatpush.msra.mxu0 %v44
    %527 = vmatmul.f32.gmra.mxu0 %v509
    %v528 = vpop.f32.mrf.mxu0
    %v529 = vadd.f32 0.0, %v528
    %530 = vdwg.mxu0
    %533 = vrot.lane.b32.xlu0 %v453, 32
    %v534 = vpop.permute.xlu0 %533
    %535 = vrot.lane.b32.xlu0 %v473, 32
    %v536 = vpop.permute.xlu0 %535
    %v537 = vsel %vm228, %v534, %v536
    %v539 = vadd.f32 %v529, %v537
    %v540 = vadd.f32 %v539, %v147
    %v541 = vmul.f32 %v540, 0.5
    %v542 = vtanh.pop %v541
    %v543 = vmul.f32 %v542, 0.5
    %v544 = vadd.f32 %v543, 0.5
    %v545 = vadd.f32 %v529, %v267
    %v546 = vadd.f32 %v473, %v272
    %548 = vrot.lane.b32.xlu0 %v546, 96
    %v549 = vpop.permute.xlu0 %548
    %v551 = vmul.f32 %v544, %v549
    %553 = vrot.lane.b32.xlu0 %v551, 64
    %v554 = vpop.permute.xlu0 %553
    %v556 = vadd.f32 %v545, %v554
    %v557 = vtanh.pop %v556
    %v558 = vsub.f32 1.0, %v544
    %560 = vrot.lane.b32.xlu0 %v557, 96
    %v561 = vpop.permute.xlu0 %560
    %v563 = vmul.f32 %v558, %v561
    %v564 = vmul.f32 %v544, %v431
    %v565 = vadd.f32 %v563, %v564
    %v567 = vsel %vm228, %v508, %v565
    %v569 = vsel %vm150, %v567, 0
    %571 = vmatpush.msra.mxu0 0.0
    %572 = vmatpush.msra.mxu0 0.0
    %573 = vmatpush.msra.mxu0 0.0
    %574 = vmatpush.msra.mxu0 0.0
    %575 = vmatpush.msra.mxu0 0.0
    %576 = vmatpush.msra.mxu0 0.0
    %577 = vmatpush.msra.mxu0 0.0
    %578 = vmatpush.msra.mxu0 0.0
    %579 = vmatpush.msra.mxu0 %v42
    %580 = vmatpush.msra.mxu0 %v40
    %581 = vmatpush.msra.mxu0 %v38
    %582 = vmatpush.msra.mxu0 %v36
    %583 = vmatpush.msra.mxu0 %v34
    %584 = vmatpush.msra.mxu0 %v32
    %585 = vmatpush.msra.mxu0 %v30
    %586 = vmatpush.msra.mxu0 %v28
    %587 = vmatmul.f32.gmra.mxu0 %v569
    %v588 = vpop.f32.mrf.mxu0
    %v589 = vadd.f32 0.0, %v588
    %590 = vdwg.mxu0
    %591 = vmatpush.msra.mxu0 0.0
    %592 = vmatpush.msra.mxu0 0.0
    %593 = vmatpush.msra.mxu0 0.0
    %594 = vmatpush.msra.mxu0 0.0
    %595 = vmatpush.msra.mxu0 0.0
    %596 = vmatpush.msra.mxu0 0.0
    %597 = vmatpush.msra.mxu0 0.0
    %598 = vmatpush.msra.mxu0 0.0
    %599 = vmatpush.msra.mxu0 %v43
    %600 = vmatpush.msra.mxu0 %v41
    %601 = vmatpush.msra.mxu0 %v39
    %602 = vmatpush.msra.mxu0 %v37
    %603 = vmatpush.msra.mxu0 %v35
    %604 = vmatpush.msra.mxu0 %v33
    %605 = vmatpush.msra.mxu0 %v31
    %606 = vmatpush.msra.mxu0 %v29
    %607 = vmatmul.f32.gmra.mxu0 %v569
    %v608 = vpop.f32.mrf.mxu0
    %v609 = vadd.f32 0.0, %v608
    %610 = vdwg.mxu0
    %s611 = scalar_lea.vmem [#allocation2], 24
    %v612 = vld [vmem:[%s611] sm:$0xff]
    %v613 = vadd.f32 %v612, %v589
    %v614 = vadd.f32 %v613, %v145
    %v615 = vmul.f32 %v614, 0.5
    %v616 = vtanh.pop %v615
    %v617 = vmul.f32 %v616, 0.5
    %v618 = vadd.f32 %v617, 0.5
    %v619 = vadd.f32 %v589, %v203
    %621 = vrot.lane.b32.xlu0 %v619, 64
    %v622 = vpop.permute.xlu0 %621
    %v624 = vmul.f32 %v618, %v622
    %626 = vrot.lane.b32.xlu0 %v624, 64
    %v627 = vpop.permute.xlu0 %626
    %v629 = vadd.f32 %v612, %v627
    %v630 = vtanh.pop %v629
    %v631 = vsub.f32 1.0, %v618
    %633 = vrot.lane.b32.xlu0 %v630, 96
    %v634 = vpop.permute.xlu0 %633
    %v636 = vmul.f32 %v631, %v634
    %637 = vrot.lane.b32.xlu0 %v567, 32
    %v638 = vpop.permute.xlu0 %637
    %v640 = vmul.f32 %v618, %v638
    %v641 = vadd.f32 %v636, %v640
    %643 = vrot.lane.b32.xlu0 %v641, 96
    %v644 = vpop.permute.xlu0 %643
    %v645 = vsel %vm228, %v644, 0
    %647 = vmatpush.msra.mxu0 0.0
    %648 = vmatpush.msra.mxu0 0.0
    %649 = vmatpush.msra.mxu0 0.0
    %650 = vmatpush.msra.mxu0 0.0
    %651 = vmatpush.msra.mxu0 0.0
    %652 = vmatpush.msra.mxu0 0.0
    %653 = vmatpush.msra.mxu0 0.0
    %654 = vmatpush.msra.mxu0 0.0
    %655 = vmatpush.msra.mxu0 0.0
    %656 = vmatpush.msra.mxu0 0.0
    %657 = vmatpush.msra.mxu0 0.0
    %658 = vmatpush.msra.mxu0 0.0
    %659 = vmatpush.msra.mxu0 %v47
    %660 = vmatpush.msra.mxu0 %v46
    %661 = vmatpush.msra.mxu0 %v45
    %662 = vmatpush.msra.mxu0 %v44
    %663 = vmatmul.f32.gmra.mxu0 %v645
    %v664 = vpop.f32.mrf.mxu0
    %v665 = vadd.f32 0.0, %v664
    %666 = vdwg.mxu0
    %669 = vrot.lane.b32.xlu0 %v589, 32
    %v670 = vpop.permute.xlu0 %669
    %671 = vrot.lane.b32.xlu0 %v609, 32
    %v672 = vpop.permute.xlu0 %671
    %v673 = vsel %vm228, %v670, %v672
    %v675 = vadd.f32 %v665, %v673
    %v676 = vadd.f32 %v675, %v147
    %v677 = vmul.f32 %v676, 0.5
    %v678 = vtanh.pop %v677
    %v679 = vmul.f32 %v678, 0.5
    %v680 = vadd.f32 %v679, 0.5
    %v681 = vadd.f32 %v665, %v267
    %v682 = vadd.f32 %v609, %v272
    %684 = vrot.lane.b32.xlu0 %v682, 96
    %v685 = vpop.permute.xlu0 %684
    %v687 = vmul.f32 %v680, %v685
    %689 = vrot.lane.b32.xlu0 %v687, 64
    %v690 = vpop.permute.xlu0 %689
    %v692 = vadd.f32 %v681, %v690
    %v693 = vtanh.pop %v692
    %v694 = vsub.f32 1.0, %v680
    %696 = vrot.lane.b32.xlu0 %v693, 96
    %v697 = vpop.permute.xlu0 %696
    %v699 = vmul.f32 %v694, %v697
    %v700 = vmul.f32 %v680, %v567
    %v701 = vadd.f32 %v699, %v700
    %v703 = vsel %vm228, %v644, %v701
    %v705 = vsel %vm150, %v703, 0
    %707 = vmatpush.msra.mxu0 0.0
    %708 = vmatpush.msra.mxu0 0.0
    %709 = vmatpush.msra.mxu0 0.0
    %710 = vmatpush.msra.mxu0 0.0
    %711 = vmatpush.msra.mxu0 0.0
    %712 = vmatpush.msra.mxu0 0.0
    %713 = vmatpush.msra.mxu0 0.0
    %714 = vmatpush.msra.mxu0 0.0
    %715 = vmatpush.msra.mxu0 %v42
    %716 = vmatpush.msra.mxu0 %v40
    %717 = vmatpush.msra.mxu0 %v38
    %718 = vmatpush.msra.mxu0 %v36
    %719 = vmatpush.msra.mxu0 %v34
    %720 = vmatpush.msra.mxu0 %v32
    %721 = vmatpush.msra.mxu0 %v30
    %722 = vmatpush.msra.mxu0 %v28
    %723 = vmatmul.f32.gmra.mxu0 %v705
    %v724 = vpop.f32.mrf.mxu0
    %v725 = vadd.f32 0.0, %v724
    %726 = vdwg.mxu0
    %727 = vmatpush.msra.mxu0 0.0
    %728 = vmatpush.msra.mxu0 0.0
    %729 = vmatpush.msra.mxu0 0.0
    %730 = vmatpush.msra.mxu0 0.0
    %731 = vmatpush.msra.mxu0 0.0
    %732 = vmatpush.msra.mxu0 0.0
    %733 = vmatpush.msra.mxu0 0.0
    %734 = vmatpush.msra.mxu0 0.0
    %735 = vmatpush.msra.mxu0 %v43
    %736 = vmatpush.msra.mxu0 %v41
    %737 = vmatpush.msra.mxu0 %v39
    %738 = vmatpush.msra.mxu0 %v37
    %739 = vmatpush.msra.mxu0 %v35
    %740 = vmatpush.msra.mxu0 %v33
    %741 = vmatpush.msra.mxu0 %v31
    %742 = vmatpush.msra.mxu0 %v29
    %743 = vmatmul.f32.gmra.mxu0 %v705
    %v744 = vpop.f32.mrf.mxu0
    %v745 = vadd.f32 0.0, %v744
    %746 = vdwg.mxu0
    %s747 = scalar_lea.vmem [#allocation2], 32
    %v748 = vld [vmem:[%s747] sm:$0xff]
    %v749 = vadd.f32 %v748, %v725
    %v750 = vadd.f32 %v749, %v145
    %v751 = vmul.f32 %v750, 0.5
    %v752 = vtanh.pop %v751
    %v753 = vmul.f32 %v752, 0.5
    %v754 = vadd.f32 %v753, 0.5
    %v755 = vadd.f32 %v725, %v203
    %757 = vrot.lane.b32.xlu0 %v755, 64
    %v758 = vpop.permute.xlu0 %757
    %v760 = vmul.f32 %v754, %v758
    %762 = vrot.lane.b32.xlu0 %v760, 64
    %v763 = vpop.permute.xlu0 %762
    %v765 = vadd.f32 %v748, %v763
    %v766 = vtanh.pop %v765
    %v767 = vsub.f32 1.0, %v754
    %769 = vrot.lane.b32.xlu0 %v766, 96
    %v770 = vpop.permute.xlu0 %769
    %v772 = vmul.f32 %v767, %v770
    %773 = vrot.lane.b32.xlu0 %v703, 32
    %v774 = vpop.permute.xlu0 %773
    %v776 = vmul.f32 %v754, %v774
    %v777 = vadd.f32 %v772, %v776
    %779 = vrot.lane.b32.xlu0 %v777, 96
    %v780 = vpop.permute.xlu0 %779
    %v781 = vsel %vm228, %v780, 0
    %783 = vmatpush.msra.mxu0 0.0
    %784 = vmatpush.msra.mxu0 0.0
    %785 = vmatpush.msra.mxu0 0.0
    %786 = vmatpush.msra.mxu0 0.0
    %787 = vmatpush.msra.mxu0 0.0
    %788 = vmatpush.msra.mxu0 0.0
    %789 = vmatpush.msra.mxu0 0.0
    %790 = vmatpush.msra.mxu0 0.0
    %791 = vmatpush.msra.mxu0 0.0
    %792 = vmatpush.msra.mxu0 0.0
    %793 = vmatpush.msra.mxu0 0.0
    %794 = vmatpush.msra.mxu0 0.0
    %795 = vmatpush.msra.mxu0 %v47
    %796 = vmatpush.msra.mxu0 %v46
    %797 = vmatpush.msra.mxu0 %v45
    %798 = vmatpush.msra.mxu0 %v44
    %799 = vmatmul.f32.gmra.mxu0 %v781
    %v800 = vpop.f32.mrf.mxu0
    %v801 = vadd.f32 0.0, %v800
    %802 = vdwg.mxu0
    %805 = vrot.lane.b32.xlu0 %v725, 32
    %v806 = vpop.permute.xlu0 %805
    %807 = vrot.lane.b32.xlu0 %v745, 32
    %v808 = vpop.permute.xlu0 %807
    %v809 = vsel %vm228, %v806, %v808
    %v811 = vadd.f32 %v801, %v809
    %v812 = vadd.f32 %v811, %v147
    %v813 = vmul.f32 %v812, 0.5
    %v814 = vtanh.pop %v813
    %v815 = vmul.f32 %v814, 0.5
    %v816 = vadd.f32 %v815, 0.5
    %v817 = vadd.f32 %v801, %v267
    %v818 = vadd.f32 %v745, %v272
    %820 = vrot.lane.b32.xlu0 %v818, 96
    %v821 = vpop.permute.xlu0 %820
    %v823 = vmul.f32 %v816, %v821
    %825 = vrot.lane.b32.xlu0 %v823, 64
    %v826 = vpop.permute.xlu0 %825
    %v828 = vadd.f32 %v817, %v826
    %v829 = vtanh.pop %v828
    %v830 = vsub.f32 1.0, %v816
    %832 = vrot.lane.b32.xlu0 %v829, 96
    %v833 = vpop.permute.xlu0 %832
    %v835 = vmul.f32 %v830, %v833
    %v836 = vmul.f32 %v816, %v703
    %v837 = vadd.f32 %v835, %v836
    %v839 = vsel %vm228, %v780, %v837
    %v841 = vsel %vm150, %v839, 0
    %843 = vmatpush.msra.mxu0 0.0
    %844 = vmatpush.msra.mxu0 0.0
    %845 = vmatpush.msra.mxu0 0.0
    %846 = vmatpush.msra.mxu0 0.0
    %847 = vmatpush.msra.mxu0 0.0
    %848 = vmatpush.msra.mxu0 0.0
    %849 = vmatpush.msra.mxu0 0.0
    %850 = vmatpush.msra.mxu0 0.0
    %851 = vmatpush.msra.mxu0 %v42
    %852 = vmatpush.msra.mxu0 %v40
    %853 = vmatpush.msra.mxu0 %v38
    %854 = vmatpush.msra.mxu0 %v36
    %855 = vmatpush.msra.mxu0 %v34
    %856 = vmatpush.msra.mxu0 %v32
    %857 = vmatpush.msra.mxu0 %v30
    %858 = vmatpush.msra.mxu0 %v28
    %859 = vmatmul.f32.gmra.mxu0 %v841
    %v860 = vpop.f32.mrf.mxu0
    %v861 = vadd.f32 0.0, %v860
    %862 = vdwg.mxu0
    %863 = vmatpush.msra.mxu0 0.0
    %864 = vmatpush.msra.mxu0 0.0
    %865 = vmatpush.msra.mxu0 0.0
    %866 = vmatpush.msra.mxu0 0.0
    %867 = vmatpush.msra.mxu0 0.0
    %868 = vmatpush.msra.mxu0 0.0
    %869 = vmatpush.msra.mxu0 0.0
    %870 = vmatpush.msra.mxu0 0.0
    %871 = vmatpush.msra.mxu0 %v43
    %872 = vmatpush.msra.mxu0 %v41
    %873 = vmatpush.msra.mxu0 %v39
    %874 = vmatpush.msra.mxu0 %v37
    %875 = vmatpush.msra.mxu0 %v35
    %876 = vmatpush.msra.mxu0 %v33
    %877 = vmatpush.msra.mxu0 %v31
    %878 = vmatpush.msra.mxu0 %v29
    %879 = vmatmul.f32.gmra.mxu0 %v841
    %v880 = vpop.f32.mrf.mxu0
    %v881 = vadd.f32 0.0, %v880
    %882 = vdwg.mxu0
    %s883 = scalar_lea.vmem [#allocation2], 40
    %v884 = vld [vmem:[%s883] sm:$0xff]
    %v885 = vadd.f32 %v884, %v861
    %v886 = vadd.f32 %v885, %v145
    %v887 = vmul.f32 %v886, 0.5
    %v888 = vtanh.pop %v887
    %v889 = vmul.f32 %v888, 0.5
    %v890 = vadd.f32 %v889, 0.5
    %v891 = vadd.f32 %v861, %v203
    %893 = vrot.lane.b32.xlu0 %v891, 64
    %v894 = vpop.permute.xlu0 %893
    %v896 = vmul.f32 %v890, %v894
    %898 = vrot.lane.b32.xlu0 %v896, 64
    %v899 = vpop.permute.xlu0 %898
    %v901 = vadd.f32 %v884, %v899
    %v902 = vtanh.pop %v901
    %v903 = vsub.f32 1.0, %v890
    %905 = vrot.lane.b32.xlu0 %v902, 96
    %v906 = vpop.permute.xlu0 %905
    %v908 = vmul.f32 %v903, %v906
    %909 = vrot.lane.b32.xlu0 %v839, 32
    %v910 = vpop.permute.xlu0 %909
    %v912 = vmul.f32 %v890, %v910
    %v913 = vadd.f32 %v908, %v912
    %915 = vrot.lane.b32.xlu0 %v913, 96
    %v916 = vpop.permute.xlu0 %915
    %v917 = vsel %vm228, %v916, 0
    %919 = vmatpush.msra.mxu0 0.0
    %920 = vmatpush.msra.mxu0 0.0
    %921 = vmatpush.msra.mxu0 0.0
    %922 = vmatpush.msra.mxu0 0.0
    %923 = vmatpush.msra.mxu0 0.0
    %924 = vmatpush.msra.mxu0 0.0
    %925 = vmatpush.msra.mxu0 0.0
    %926 = vmatpush.msra.mxu0 0.0
    %927 = vmatpush.msra.mxu0 0.0
    %928 = vmatpush.msra.mxu0 0.0
    %929 = vmatpush.msra.mxu0 0.0
    %930 = vmatpush.msra.mxu0 0.0
    %931 = vmatpush.msra.mxu0 %v47
    %932 = vmatpush.msra.mxu0 %v46
    %933 = vmatpush.msra.mxu0 %v45
    %934 = vmatpush.msra.mxu0 %v44
    %935 = vmatmul.f32.gmra.mxu0 %v917
    %v936 = vpop.f32.mrf.mxu0
    %v937 = vadd.f32 0.0, %v936
    %938 = vdwg.mxu0
    %941 = vrot.lane.b32.xlu0 %v861, 32
    %v942 = vpop.permute.xlu0 %941
    %943 = vrot.lane.b32.xlu0 %v881, 32
    %v944 = vpop.permute.xlu0 %943
    %v945 = vsel %vm228, %v942, %v944
    %v947 = vadd.f32 %v937, %v945
    %v948 = vadd.f32 %v947, %v147
    %v949 = vmul.f32 %v948, 0.5
    %v950 = vtanh.pop %v949
    %v951 = vmul.f32 %v950, 0.5
    %v952 = vadd.f32 %v951, 0.5
    %v953 = vadd.f32 %v937, %v267
    %v954 = vadd.f32 %v881, %v272
    %956 = vrot.lane.b32.xlu0 %v954, 96
    %v957 = vpop.permute.xlu0 %956
    %v959 = vmul.f32 %v952, %v957
    %961 = vrot.lane.b32.xlu0 %v959, 64
    %v962 = vpop.permute.xlu0 %961
    %v964 = vadd.f32 %v953, %v962
    %v965 = vtanh.pop %v964
    %v966 = vsub.f32 1.0, %v952
    %968 = vrot.lane.b32.xlu0 %v965, 96
    %v969 = vpop.permute.xlu0 %968
    %v971 = vmul.f32 %v966, %v969
    %v972 = vmul.f32 %v952, %v839
    %v973 = vadd.f32 %v971, %v972
    %v975 = vsel %vm228, %v916, %v973
    %v977 = vsel %vm150, %v975, 0
    %979 = vmatpush.msra.mxu0 0.0
    %980 = vmatpush.msra.mxu0 0.0
    %981 = vmatpush.msra.mxu0 0.0
    %982 = vmatpush.msra.mxu0 0.0
    %983 = vmatpush.msra.mxu0 0.0
    %984 = vmatpush.msra.mxu0 0.0
    %985 = vmatpush.msra.mxu0 0.0
    %986 = vmatpush.msra.mxu0 0.0
    %987 = vmatpush.msra.mxu0 %v42
    %988 = vmatpush.msra.mxu0 %v40
    %989 = vmatpush.msra.mxu0 %v38
    %990 = vmatpush.msra.mxu0 %v36
    %991 = vmatpush.msra.mxu0 %v34
    %992 = vmatpush.msra.mxu0 %v32
    %993 = vmatpush.msra.mxu0 %v30
    %994 = vmatpush.msra.mxu0 %v28
    %995 = vmatmul.f32.gmra.mxu0 %v977
    %v996 = vpop.f32.mrf.mxu0
    %v997 = vadd.f32 0.0, %v996
    %998 = vdwg.mxu0
    %999 = vmatpush.msra.mxu0 0.0
    %1000 = vmatpush.msra.mxu0 0.0
    %1001 = vmatpush.msra.mxu0 0.0
    %1002 = vmatpush.msra.mxu0 0.0
    %1003 = vmatpush.msra.mxu0 0.0
    %1004 = vmatpush.msra.mxu0 0.0
    %1005 = vmatpush.msra.mxu0 0.0
    %1006 = vmatpush.msra.mxu0 0.0
    %1007 = vmatpush.msra.mxu0 %v43
    %1008 = vmatpush.msra.mxu0 %v41
    %1009 = vmatpush.msra.mxu0 %v39
    %1010 = vmatpush.msra.mxu0 %v37
    %1011 = vmatpush.msra.mxu0 %v35
    %1012 = vmatpush.msra.mxu0 %v33
    %1013 = vmatpush.msra.mxu0 %v31
    %1014 = vmatpush.msra.mxu0 %v29
    %1015 = vmatmul.f32.gmra.mxu0 %v977
    %v1016 = vpop.f32.mrf.mxu0
    %v1017 = vadd.f32 0.0, %v1016
    %1018 = vdwg.mxu0
    %s1019 = scalar_lea.vmem [#allocation2], 48
    %v1020 = vld [vmem:[%s1019] sm:$0xff]
    %v1021 = vadd.f32 %v1020, %v997
    %v1022 = vadd.f32 %v1021, %v145
    %v1023 = vmul.f32 %v1022, 0.5
    %v1024 = vtanh.pop %v1023
    %v1025 = vmul.f32 %v1024, 0.5
    %v1026 = vadd.f32 %v1025, 0.5
    %v1027 = vadd.f32 %v997, %v203
    %1029 = vrot.lane.b32.xlu0 %v1027, 64
    %v1030 = vpop.permute.xlu0 %1029
    %v1032 = vmul.f32 %v1026, %v1030
    %1034 = vrot.lane.b32.xlu0 %v1032, 64
    %v1035 = vpop.permute.xlu0 %1034
    %v1037 = vadd.f32 %v1020, %v1035
    %v1038 = vtanh.pop %v1037
    %v1039 = vsub.f32 1.0, %v1026
    %1041 = vrot.lane.b32.xlu0 %v1038, 96
    %v1042 = vpop.permute.xlu0 %1041
    %v1044 = vmul.f32 %v1039, %v1042
    %1045 = vrot.lane.b32.xlu0 %v975, 32
    %v1046 = vpop.permute.xlu0 %1045
    %v1048 = vmul.f32 %v1026, %v1046
    %v1049 = vadd.f32 %v1044, %v1048
    %1051 = vrot.lane.b32.xlu0 %v1049, 96
    %v1052 = vpop.permute.xlu0 %1051
    %v1053 = vsel %vm228, %v1052, 0
    %1055 = vmatpush.msra.mxu0 0.0
    %1056 = vmatpush.msra.mxu0 0.0
    %1057 = vmatpush.msra.mxu0 0.0
    %1058 = vmatpush.msra.mxu0 0.0
    %1059 = vmatpush.msra.mxu0 0.0
    %1060 = vmatpush.msra.mxu0 0.0
    %1061 = vmatpush.msra.mxu0 0.0
    %1062 = vmatpush.msra.mxu0 0.0
    %1063 = vmatpush.msra.mxu0 0.0
    %1064 = vmatpush.msra.mxu0 0.0
    %1065 = vmatpush.msra.mxu0 0.0
    %1066 = vmatpush.msra.mxu0 0.0
    %1067 = vmatpush.msra.mxu0 %v47
    %1068 = vmatpush.msra.mxu0 %v46
    %1069 = vmatpush.msra.mxu0 %v45
    %1070 = vmatpush.msra.mxu0 %v44
    %1071 = vmatmul.f32.gmra.mxu0 %v1053
    %v1072 = vpop.f32.mrf.mxu0
    %v1073 = vadd.f32 0.0, %v1072
    %1074 = vdwg.mxu0
    %1077 = vrot.lane.b32.xlu0 %v997, 32
    %v1078 = vpop.permute.xlu0 %1077
    %1079 = vrot.lane.b32.xlu0 %v1017, 32
    %v1080 = vpop.permute.xlu0 %1079
    %v1081 = vsel %vm228, %v1078, %v1080
    %v1083 = vadd.f32 %v1073, %v1081
    %v1084 = vadd.f32 %v1083, %v147
    %v1085 = vmul.f32 %v1084, 0.5
    %v1086 = vtanh.pop %v1085
    %v1087 = vmul.f32 %v1086, 0.5
    %v1088 = vadd.f32 %v1087, 0.5
    %v1089 = vadd.f32 %v1073, %v267
    %v1090 = vadd.f32 %v1017, %v272
    %1092 = vrot.lane.b32.xlu0 %v1090, 96
    %v1093 = vpop.permute.xlu0 %1092
    %v1095 = vmul.f32 %v1088, %v1093
    %1097 = vrot.lane.b32.xlu0 %v1095, 64
    %v1098 = vpop.permute.xlu0 %1097
    %v1100 = vadd.f32 %v1089, %v1098
    %v1101 = vtanh.pop %v1100
    %v1102 = vsub.f32 1.0, %v1088
    %1104 = vrot.lane.b32.xlu0 %v1101, 96
    %v1105 = vpop.permute.xlu0 %1104
    %v1107 = vmul.f32 %v1102, %v1105
    %v1108 = vmul.f32 %v1088, %v975
    %v1109 = vadd.f32 %v1107, %v1108
    %v1111 = vsel %vm228, %v1052, %v1109
    %v1113 = vsel %vm150, %v1111, 0
    %1115 = vmatpush.msra.mxu0 0.0
    %1116 = vmatpush.msra.mxu0 0.0
    %1117 = vmatpush.msra.mxu0 0.0
    %1118 = vmatpush.msra.mxu0 0.0
    %1119 = vmatpush.msra.mxu0 0.0
    %1120 = vmatpush.msra.mxu0 0.0
    %1121 = vmatpush.msra.mxu0 0.0
    %1122 = vmatpush.msra.mxu0 0.0
    %1123 = vmatpush.msra.mxu0 %v42
    %1124 = vmatpush.msra.mxu0 %v40
    %1125 = vmatpush.msra.mxu0 %v38
    %1126 = vmatpush.msra.mxu0 %v36
    %1127 = vmatpush.msra.mxu0 %v34
    %1128 = vmatpush.msra.mxu0 %v32
    %1129 = vmatpush.msra.mxu0 %v30
    %1130 = vmatpush.msra.mxu0 %v28
    %1131 = vmatmul.f32.gmra.mxu0 %v1113
    %v1132 = vpop.f32.mrf.mxu0
    %v1133 = vadd.f32 0.0, %v1132
    %1134 = vdwg.mxu0
    %1135 = vmatpush.msra.mxu0 0.0
    %1136 = vmatpush.msra.mxu0 0.0
    %1137 = vmatpush.msra.mxu0 0.0
    %1138 = vmatpush.msra.mxu0 0.0
    %1139 = vmatpush.msra.mxu0 0.0
    %1140 = vmatpush.msra.mxu0 0.0
    %1141 = vmatpush.msra.mxu0 0.0
    %1142 = vmatpush.msra.mxu0 0.0
    %1143 = vmatpush.msra.mxu0 %v43
    %1144 = vmatpush.msra.mxu0 %v41
    %1145 = vmatpush.msra.mxu0 %v39
    %1146 = vmatpush.msra.mxu0 %v37
    %1147 = vmatpush.msra.mxu0 %v35
    %1148 = vmatpush.msra.mxu0 %v33
    %1149 = vmatpush.msra.mxu0 %v31
    %1150 = vmatpush.msra.mxu0 %v29
    %1151 = vmatmul.f32.gmra.mxu0 %v1113
    %v1152 = vpop.f32.mrf.mxu0
    %v1153 = vadd.f32 0.0, %v1152
    %1154 = vdwg.mxu0
    %s1155 = scalar_lea.vmem [#allocation2], 56
    %v1156 = vld [vmem:[%s1155] sm:$0xff]
    %v1157 = vadd.f32 %v1156, %v1133
    %v1158 = vadd.f32 %v1157, %v145
    %v1159 = vmul.f32 %v1158, 0.5
    %v1160 = vtanh.pop %v1159
    %v1161 = vmul.f32 %v1160, 0.5
    %v1162 = vadd.f32 %v1161, 0.5
    %v1163 = vadd.f32 %v1133, %v203
    %1165 = vrot.lane.b32.xlu0 %v1163, 64
    %v1166 = vpop.permute.xlu0 %1165
    %v1168 = vmul.f32 %v1162, %v1166
    %1170 = vrot.lane.b32.xlu0 %v1168, 64
    %v1171 = vpop.permute.xlu0 %1170
    %v1173 = vadd.f32 %v1156, %v1171
    %v1174 = vtanh.pop %v1173
    %v1175 = vsub.f32 1.0, %v1162
    %1177 = vrot.lane.b32.xlu0 %v1174, 96
    %v1178 = vpop.permute.xlu0 %1177
    %v1180 = vmul.f32 %v1175, %v1178
    %1181 = vrot.lane.b32.xlu0 %v1111, 32
    %v1182 = vpop.permute.xlu0 %1181
    %v1184 = vmul.f32 %v1162, %v1182
    %v1185 = vadd.f32 %v1180, %v1184
    %1187 = vrot.lane.b32.xlu0 %v1185, 96
    %v1188 = vpop.permute.xlu0 %1187
    %v1189 = vsel %vm228, %v1188, 0
    %1191 = vmatpush.msra.mxu0 0.0
    %1192 = vmatpush.msra.mxu0 0.0
    %1193 = vmatpush.msra.mxu0 0.0
    %1194 = vmatpush.msra.mxu0 0.0
    %1195 = vmatpush.msra.mxu0 0.0
    %1196 = vmatpush.msra.mxu0 0.0
    %1197 = vmatpush.msra.mxu0 0.0
    %1198 = vmatpush.msra.mxu0 0.0
    %1199 = vmatpush.msra.mxu0 0.0
    %1200 = vmatpush.msra.mxu0 0.0
    %1201 = vmatpush.msra.mxu0 0.0
    %1202 = vmatpush.msra.mxu0 0.0
    %1203 = vmatpush.msra.mxu0 %v47
    %1204 = vmatpush.msra.mxu0 %v46
    %1205 = vmatpush.msra.mxu0 %v45
    %1206 = vmatpush.msra.mxu0 %v44
    %1207 = vmatmul.f32.gmra.mxu0 %v1189
    %v1208 = vpop.f32.mrf.mxu0
    %v1209 = vadd.f32 0.0, %v1208
    %1210 = vdwg.mxu0
    %1213 = vrot.lane.b32.xlu0 %v1133, 32
    %v1214 = vpop.permute.xlu0 %1213
    %1215 = vrot.lane.b32.xlu0 %v1153, 32
    %v1216 = vpop.permute.xlu0 %1215
    %v1217 = vsel %vm228, %v1214, %v1216
    %v1219 = vadd.f32 %v1209, %v1217
    %v1220 = vadd.f32 %v1219, %v147
    %v1221 = vmul.f32 %v1220, 0.5
    %v1222 = vtanh.pop %v1221
    %v1223 = vmul.f32 %v1222, 0.5
    %v1224 = vadd.f32 %v1223, 0.5
    %v1225 = vadd.f32 %v1209, %v267
    %v1226 = vadd.f32 %v1153, %v272
    %1228 = vrot.lane.b32.xlu0 %v1226, 96
    %v1229 = vpop.permute.xlu0 %1228
    %v1231 = vmul.f32 %v1224, %v1229
    %1233 = vrot.lane.b32.xlu0 %v1231, 64
    %v1234 = vpop.permute.xlu0 %1233
    %v1236 = vadd.f32 %v1225, %v1234
    %v1237 = vtanh.pop %v1236
    %v1238 = vsub.f32 1.0, %v1224
    %1240 = vrot.lane.b32.xlu0 %v1237, 96
    %v1241 = vpop.permute.xlu0 %1240
    %v1243 = vmul.f32 %v1238, %v1241
    %v1244 = vmul.f32 %v1224, %v1111
    %v1245 = vadd.f32 %v1243, %v1244
    %v1247 = vsel %vm228, %v1188, %v1245
    %v1248 = vld [vmem:[%s0 + $0x40] sm:$0xff]
    %v1249 = vperm.slane %v59, 0
    %v1250 = vperm.slane %v60, 0
    %vm1251 = vcmask 195584
    %v1253 = vsel %vm1251, %v1248, 0
    %1255 = vmatpush.msra.mxu0 0.0
    %1256 = vmatpush.msra.mxu0 0.0
    %1257 = vmatpush.msra.mxu0 0.0
    %1258 = vmatpush.msra.mxu0 0.0
    %1259 = vmatpush.msra.mxu0 0.0
    %1260 = vmatpush.msra.mxu0 0.0
    %1261 = vmatpush.msra.mxu0 0.0
    %1262 = vmatpush.msra.mxu0 0.0
    %1263 = vmatpush.msra.mxu0 0.0
    %1264 = vmatpush.msra.mxu0 0.0
    %1265 = vmatpush.msra.mxu0 0.0
    %1266 = vmatpush.msra.mxu0 0.0
    %1267 = vmatpush.msra.mxu0 0.0
    %1268 = vmatpush.msra.mxu0 %v53
    %1269 = vmatpush.msra.mxu0 %v51
    %1270 = vmatpush.msra.mxu0 %v49
    %1271 = vmatmul.f32.gmra.mxu0 %v1253
    %v1272 = vpop.f32.mrf.mxu0
    %v1273 = vadd.f32 %v1249, %v1272
    %1274 = vdwg.mxu0
    %1275 = vmatpush.msra.mxu0 0.0
    %1276 = vmatpush.msra.mxu0 0.0
    %1277 = vmatpush.msra.mxu0 0.0
    %1278 = vmatpush.msra.mxu0 0.0
    %1279 = vmatpush.msra.mxu0 0.0
    %1280 = vmatpush.msra.mxu0 0.0
    %1281 = vmatpush.msra.mxu0 0.0
    %1282 = vmatpush.msra.mxu0 0.0
    %1283 = vmatpush.msra.mxu0 0.0
    %1284 = vmatpush.msra.mxu0 0.0
    %1285 = vmatpush.msra.mxu0 0.0
    %1286 = vmatpush.msra.mxu0 0.0
    %1287 = vmatpush.msra.mxu0 0.0
    %1288 = vmatpush.msra.mxu0 %v54
    %1289 = vmatpush.msra.mxu0 %v52
    %1290 = vmatpush.msra.mxu0 %v50
    %1291 = vmatmul.f32.gmra.mxu0 %v1253
    %v1292 = vpop.f32.mrf.mxu0
    %v1293 = vadd.f32 %v1250, %v1292
    %1294 = vdwg.mxu0
    %1295 = vmatpush.xpose.msra.mxu0 0.0
    %1296 = vmatpush.xpose.msra.mxu0 0.0
    %1297 = vmatpush.xpose.msra.mxu0 0.0
    %1298 = vmatpush.xpose.msra.mxu0 0.0
    %1299 = vmatpush.xpose.msra.mxu0 0.0
    %1300 = vmatpush.xpose.msra.mxu0 0.0
    %1301 = vmatpush.xpose.msra.mxu0 0.0
    %1302 = vmatpush.xpose.msra.mxu0 0.0
    %1303 = vmatpush.xpose.msra.mxu0 0.0
    %1304 = vmatpush.xpose.msra.mxu0 0.0
    %1305 = vmatpush.xpose.msra.mxu0 0.0
    %1306 = vmatpush.xpose.msra.mxu0 0.0
    %1307 = vmatpush.xpose.msra.mxu0 0.0
    %1308 = vmatpush.xpose.msra.mxu0 0.0
    %1309 = vmatpush.xpose.msra.mxu0 0.0
    %1310 = vmatpush.xpose.msra.mxu0 %v1293
    %1311 = vmatmul.f32.gmra.mxu0 %v1273
    %v1312 = vpop.f32.mrf.mxu0
    %v1313 = vadd.f32 0.0, %v1312
    %1314 = vdwg.mxu0
    %v1315 = vmul.f32 %v1313, 0.25
    %v1316 = vsel %vm70, %v1315, -inf
    %1317 = vmax.xlane.f32.xlu0 %v1316
    %v1318 = vpop.xlane.xlu0 %1317
    %v1319 = vsub.f32 %v1315, %v1318
    %v1320 = vmul.f32 %v1319, 1.442695
    %v1321 = vpow.pop %v1320
    %v1322 = vsel %vm70, %v1321, 0.0
    %1323 = vadd.xlane.f32.xlu0 %v1322
    %v1324 = vpop.xlane.xlu0 %1323
    %v1325 = vrcp.pop %v1324
    %v1326 = vmul.f32 %v1321, %v1325
    %1328 = vrot.lane.b32.xlu0 %v1247, 96
    %v1329 = vpop.permute.xlu0 %1328
    %v1330 = vsel %vm228, %v1329, 0
    %1332 = vmatpush.msra.mxu0 0.0
    %1333 = vmatpush.msra.mxu0 0.0
    %1334 = vmatpush.msra.mxu0 0.0
    %1335 = vmatpush.msra.mxu0 0.0
    %1336 = vmatpush.msra.mxu0 0.0
    %1337 = vmatpush.msra.mxu0 0.0
    %1338 = vmatpush.msra.mxu0 0.0
    %1339 = vmatpush.msra.mxu0 0.0
    %1340 = vmatpush.msra.mxu0 0.0
    %1341 = vmatpush.msra.mxu0 0.0
    %1342 = vmatpush.msra.mxu0 0.0
    %1343 = vmatpush.msra.mxu0 0.0
    %1344 = vmatpush.msra.mxu0 %v58
    %1345 = vmatpush.msra.mxu0 %v57
    %1346 = vmatpush.msra.mxu0 %v56
    %1347 = vmatpush.msra.mxu0 %v55
    %1348 = vmatmul.f32.gmra.mxu0 %v1330
    %v1349 = vpop.f32.mrf.mxu0
    %v1350 = vadd.f32 0.0, %v1349
    %1351 = vdwg.mxu0
    %v1352 = vperm.slane %v59, 1
    %v1353 = vadd.f32 %v1350, %v1352
    %v1355 = vsel %vm70, %v1326, 0
    %1357 = vmatpush.msra.mxu0 0.0
    %1358 = vmatpush.msra.mxu0 0.0
    %1359 = vmatpush.msra.mxu0 0.0
    %1360 = vmatpush.msra.mxu0 0.0
    %1361 = vmatpush.msra.mxu0 0.0
    %1362 = vmatpush.msra.mxu0 0.0
    %1363 = vmatpush.msra.mxu0 0.0
    %1364 = vmatpush.msra.mxu0 0.0
    %1365 = vmatpush.msra.mxu0 0.0
    %1366 = vmatpush.msra.mxu0 0.0
    %1367 = vmatpush.msra.mxu0 0.0
    %1368 = vmatpush.msra.mxu0 0.0
    %1369 = vmatpush.msra.mxu0 0.0
    %1370 = vmatpush.msra.mxu0 0.0
    %1371 = vmatpush.msra.mxu0 0.0
    %1372 = vmatpush.msra.mxu0 %v1353
    %1373 = vmatmul.f32.gmra.mxu0 %v1355
    %v1374 = vpop.f32.mrf.mxu0
    %v1375 = vadd.f32 0.0, %v1374
    %1376 = vdwg.mxu0
    %1381 = vrot.lane.b32.xlu0 %v55, 64
    %v1382 = vpop.permute.xlu0 %1381
    %1383 = vrot.lane.b32.xlu0 %v56, 64
    %v1384 = vpop.permute.xlu0 %1383
    %1385 = vrot.lane.b32.xlu0 %v57, 64
    %v1386 = vpop.permute.xlu0 %1385
    %1387 = vrot.lane.b32.xlu0 %v58, 64
    %v1388 = vpop.permute.xlu0 %1387
    %v1394 = vsel %vm228, %v1375, 0
    %1396 = vmatpush.msra.mxu0 0.0
    %1397 = vmatpush.msra.mxu0 0.0
    %1398 = vmatpush.msra.mxu0 0.0
    %1399 = vmatpush.msra.mxu0 0.0
    %1400 = vmatpush.msra.mxu0 0.0
    %1401 = vmatpush.msra.mxu0 0.0
    %1402 = vmatpush.msra.mxu0 0.0
    %1403 = vmatpush.msra.mxu0 0.0
    %1404 = vmatpush.msra.mxu0 0.0
    %1405 = vmatpush.msra.mxu0 0.0
    %1406 = vmatpush.msra.mxu0 0.0
    %1407 = vmatpush.msra.mxu0 0.0
    %1408 = vmatpush.msra.mxu0 %v1388
    %1409 = vmatpush.msra.mxu0 %v1386
    %1410 = vmatpush.msra.mxu0 %v1384
    %1411 = vmatpush.msra.mxu0 %v1382
    %1412 = vmatmul.f32.gmra.mxu0 %v1394
    %v1413 = vpop.f32.mrf.mxu0
    %v1414 = vadd.f32 0.0, %v1413
    %1415 = vdwg.mxu0
    %1417 = vrot.lane.b32.xlu0 %v1414, 32
    %v1418 = vpop.permute.xlu0 %1417
    %v1420 = vadd.f32 %v1350, %v1418
    %v1421 = vperm.slane %v59, 2
    %1423 = vrot.lane.b32.xlu0 %v1421, 32
    %v1424 = vpop.permute.xlu0 %1423
    %v1426 = vadd.f32 %v1420, %v1424
    %vm1427 = vcmp.ge.f32.partialorder %v1426, 0.0
    %v1428 = vmul.f32 %v1426, 0.01
    %v1429 = vsel %vm1427, %v1426, %v1428
    %v1430 = vperm.slane %v59, 3
    %1432 = vrot.lane.b32.xlu0 %v1430, 32
    %v1433 = vpop.permute.xlu0 %1432
    %v1435 = vmul.f32 %v1429, %v1433
    %v1436 = vperm.slane %v59, 4
    %1438 = vrot.lane.b32.xlu0 %v1436, 32
    %v1439 = vpop.permute.xlu0 %1438
    %v1441 = vadd.f32 %v1435, %v1439
    %v1442 = vperm.slane %v59, 5
    %1444 = vrot.lane.b32.xlu0 %v1441, 96
    %v1445 = vpop.permute.xlu0 %1444
    %1446 = vrot.lane.b32.xlu0 %v55, 32
    %v1447 = vpop.permute.xlu0 %1446
    %1448 = vrot.lane.b32.xlu0 %v56, 32
    %v1449 = vpop.permute.xlu0 %1448
    %1450 = vrot.lane.b32.xlu0 %v57, 32
    %v1451 = vpop.permute.xlu0 %1450
    %1452 = vrot.lane.b32.xlu0 %v58, 32
    %v1453 = vpop.permute.xlu0 %1452
    %v1458 = vsel %vm228, %v1445, 0
    %1460 = vmatpush.msra.mxu0 0.0
    %1461 = vmatpush.msra.mxu0 0.0
    %1462 = vmatpush.msra.mxu0 0.0
    %1463 = vmatpush.msra.mxu0 0.0
    %1464 = vmatpush.msra.mxu0 0.0
    %1465 = vmatpush.msra.mxu0 0.0
    %1466 = vmatpush.msra.mxu0 0.0
    %1467 = vmatpush.msra.mxu0 0.0
    %1468 = vmatpush.msra.mxu0 0.0
    %1469 = vmatpush.msra.mxu0 0.0
    %1470 = vmatpush.msra.mxu0 0.0
    %1471 = vmatpush.msra.mxu0 0.0
    %1472 = vmatpush.msra.mxu0 %v1453
    %1473 = vmatpush.msra.mxu0 %v1451
    %1474 = vmatpush.msra.mxu0 %v1449
    %1475 = vmatpush.msra.mxu0 %v1447
    %1476 = vmatmul.f32.gmra.mxu0 %v1458
    %v1477 = vpop.f32.mrf.mxu0
    %v1478 = vadd.f32 %v1442, %v1477
    %1479 = vdwg.mxu0
    %vm1480 = vcmask 7168
    %1481 = vst.msk [vmem:[%s2] sm:$0xff] %vm1480, %v1478
    // Predicated region
    $region14: #{risk_att_gru_forward.1} parent=1 // pred_check
      _
    $region15: #{risk_att_gru_forward.1} parent=1 // pred_check_branch
      %1483 = sbr.rel (0) target = $region17
    $region16: #{risk_att_gru_forward.1} parent=1 // pred_region
      _
    $region17: #{risk_att_gru_forward.1} parent=1 // pred_fallthru
      _
    // Predicated region
    $region18: #{risk_att_gru_forward.1} parent=1 // pred_check
      _
    $region19: #{risk_att_gru_forward.1} parent=1 // pred_check_branch
      %1485 = sbr.rel (0) target = $region21
    $region20: #{risk_att_gru_forward.1} parent=1 // pred_region
      _
    $region21: #{risk_att_gru_forward.1} parent=1 // pred_fallthru
      _
    %1486 = vsyncpa [#allocation4], 1

</llo_original>
